<compile_context>
chip_gen: v7x
topology: tpu7x:2x2x1
jax: 0.10.0
libtpu: 0.0.40
codegen_flags: <defaults>
</compile_context>

<pallas_src>
import jax
import jax.numpy as jnp
from jax.experimental import pallas as pl
from jax.experimental.pallas import tpu as pltpu


def _round_up(n, m):
    return ((n + m - 1) // m) * m


def mlp_tabular_kernel(
    x_ref,
    w1_ref, b1_ref,
    w2_ref, b2_ref,
    wA_ref, bA_ref,      # fused [lin3 | lin3_fea]
    wB_ref, bB_ref,      # lin4_fea (rows outside the fea columns are zero)
    logits_ref,          # (TB, d_out) f32 — tiny masked store
    fea_ref,             # (TB, NB)   bf16 — cols [0, n_embd) hold tanh features
):
    d_out = logits_ref.shape[-1]

    # lin1 + ReLU   (bf16 MXU feed, f32 accumulation / elementwise)
    x = x_ref[...].astype(jnp.bfloat16)
    r1 = jnp.maximum(
        jnp.dot(x, w1_ref[...], preferred_element_type=jnp.float32) + b1_ref[...], 0.0)

    # TODO(synk): training-mode dropout (p=0.3) not emitted; inference (identity) path only.

    # lin2 + ReLU
    r2 = jnp.maximum(
        jnp.dot(r1.astype(jnp.bfloat16), w2_ref[...],
                preferred_element_type=jnp.float32) + b2_ref[...], 0.0)

    # Fused lin3 / lin3_fea: one MXU pass over r2.
    #   lanes [0, d_out)            -> lin3 logits
    #   lanes [d_out, d_out+n_half) -> lin3_fea pre-activation
    hA = jnp.dot(r2.astype(jnp.bfloat16), wA_ref[...],
                 preferred_element_type=jnp.float32) + bA_ref[...]

    # Logits: (TB, d_out) store instead of a full 128-wide slab (16 B/row vs 512 B/row).
    logits_ref[...] = hA[:, :d_out].astype(logits_ref.dtype)

    # fea branch: ReLU -> lin4_fea -> tanh.
    # Zero rows of wB outside [d_out, d_out+n_half) kill the relu'd logits / padding lanes.
    ra = jnp.maximum(hA, 0.0).astype(jnp.bfloat16)
    hB = jnp.dot(ra, wB_ref[...], preferred_element_type=jnp.float32) + bB_ref[...]
    fea_ref[...] = jnp.tanh(hB).astype(fea_ref.dtype)


def pack_params(params, d_in, d_out, n_hidden, n_half, n_embd):
    """Zero-pad + fuse the (already transposed) weights once, wrapper-side.
    Weights -> bf16 (native MXU input); biases stay f32 (VPU elementwise)."""
    w1, b1, w2, b2, w3, b3, w3f, b3f, w4f, b4f = params

    # Shape guards: the fused-column / zero-row contamination trick below relies on this
    # exact layout; any reordering silently corrupts the fea branch.
    assert w1.shape == (d_in, n_hidden) and w2.shape == (n_hidden, n_hidden)
    assert w3.shape == (n_hidden, d_out) and w3f.shape == (n_hidden, n_half)
    assert w4f.shape == (n_half, n_embd)

    H = _round_up(n_hidden, 128)
    NA = _round_up(d_out + n_half, 128)
    NB = _round_up(n_embd, 128)
    wdt = jnp.bfloat16

    def pad_w(a, shape):
        z = jnp.zeros(shape, wdt)
        return z.at[: a.shape[0], : a.shape[1]].set(a.astype(wdt))

    def pad_b(a, width):
        z = jnp.zeros((1, width), jnp.float32)
        return z.at[:, : a.shape[1]].set(a.astype(jnp.float32))

    w1p, b1p = pad_w(w1, (d_in, H)), pad_b(b1, H)
    w2p, b2p = pad_w(w2, (H, H)), pad_b(b2, H)

    # Fused A = [lin3 | lin3_fea]:
    #   columns [0, d_out)            -> lin3 (logits)
    #   columns [d_out, d_out+n_half) -> lin3_fea (fea pre-activation)
    wA = jnp.zeros((H, NA), wdt)
    wA = wA.at[:n_hidden, :d_out].set(w3.astype(wdt))
    wA = wA.at[:n_hidden, d_out:d_out + n_half].set(w3f.astype(wdt))
    bA = jnp.zeros((1, NA), jnp.float32)
    bA = bA.at[:, :d_out].set(b3.astype(jnp.float32))
    bA = bA.at[:, d_out:d_out + n_half].set(b3f.astype(jnp.float32))

    # lin4_fea consumes only the fea columns of relu(hA): rows [d_out, d_out+n_half).
    # All other rows are zero by construction so relu'd logits/padding cannot leak in.
    wB = jnp.zeros((NA, NB), wdt)
    wB = wB.at[d_out:d_out + n_half, :n_embd].set(w4f.astype(wdt))
    bB = pad_b(b4f, NB)

    return (w1p, b1p, w2p, b2p, wA, bA, wB, bB), (H, NA, NB)


def mlp_tabular_forward(x, params, *, block_b=1024, fea_dtype=jnp.bfloat16):
    """Full forward (fea_return=True, eval mode) in one batch-tiled Pallas kernel.

    Returns (logits [f32, (B, d_out)], fea [fea_dtype, (B, n_embd)])."""
    w1, _, _, _, w3, _, w3f, _, w4f, _ = params
    B, d_in = x.shape
    n_hidden = w1.shape[1]
    d_out = w3.shape[1]
    n_half = w3f.shape[1]
    n_embd = w4f.shape[1]

    packed, (H, NA, NB) = pack_params(params, d_in, d_out, n_hidden, n_half, n_embd)

    # --- Batch tiling --------------------------------------------------------
    # TB: hard multiple of 16 (bf16 sublane packing for the fea store; also satisfies the
    # (8,128) BlockSpec rule).  Keep >= 2 grid steps when possible so ("parallel",) can
    # use both TensorCores on v7x (near-neutral on single-TC v5e/v6e).
    TB = _round_up(max(16, min(block_b, B)), 16)
    if B > 16 and pl.cdiv(B, TB) < 2:
        TB = _round_up(pl.cdiv(B, 2), 16)
    n_steps = pl.cdiv(B, TB)
    B_pad = n_steps * TB
    if B_pad != B:
        x = jnp.pad(x, ((0, B_pad - B), (0, 0)))

    # NOTE: d_in (K of lin1) is deliberately NOT padded to 128 — it would 8x the x read.
    x_spec = pl.BlockSpec((TB, d_in), lambda i: (i, 0))
    # Constant index_maps => weights DMA'd once, VMEM-resident across the whole grid.
    w_specs = [pl.BlockSpec(a.shape, lambda i: (0, 0)) for a in packed]
    out_specs = (
        pl.BlockSpec((TB, d_out), lambda i: (i, 0)),   # tiny masked store (d_out lanes)
        pl.BlockSpec((TB, NB), lambda i: (i, 0)),      # lane-dense bf16 slab
    )
    out_shape = (
        jax.ShapeDtypeStruct((B_pad, d_out), jnp.float32),
        jax.ShapeDtypeStruct((B_pad, NB), fea_dtype),
    )

    # --- Cost / VMEM bookkeeping --------------------------------------------
    weight_bytes = sum(int(a.size) * a.dtype.itemsize for a in packed)
    fea_item = jnp.dtype(fea_dtype).itemsize
    flops = 2 * B_pad * (d_in * H + H * H + H * NA + NA * NB)
    bytes_accessed = (4 * B_pad * d_in + weight_bytes
                      + 4 * B_pad * d_out + fea_item * B_pad * NB)
    cost = pl.CostEstimate(flops=flops, transcendentals=B_pad * NB,
                           bytes_accessed=bytes_accessed)

    # Per-step VMEM: double-buffered I/O blocks + live f32 temporaries + 2x weights.
    vmem_est = (2 * TB * (4 * d_in + 4 * d_out + fea_item * NB)
                + 4 * TB * (2 * H + 2 * NA + NB)        # r1, r2, hA, ra, hB
                + 2 * weight_bytes)
    cp_kwargs = dict(dimension_semantics=("parallel",))
    if vmem_est > 12 * 1024 * 1024:   # only for very large TB (v5e scoped default 16 MiB)
        cp_kwargs["vmem_limit_bytes"] = min(int(vmem_est * 3 // 2), 64 * 1024 * 1024)

    logits_pad, fea_pad = pl.pallas_call(
        mlp_tabular_kernel,
        out_shape=out_shape,
        grid=(n_steps,),
        in_specs=[x_spec] + w_specs,
        out_specs=out_specs,
        compiler_params=pltpu.CompilerParams(**cp_kwargs),
        cost_estimate=cost,
    )(x, *packed)

    logits = logits_pad[:B]
    fea = fea_pad[:B, :n_embd]
    return logits, fea


def init_params(key, d_in, d_out, n_hidden, n_embd):
    """Deterministic synthetic init (shapes match the nn.Linear layers of MLP_tabular,
    stored transposed so the kernel computes y = x @ W + b)."""
    keys = jax.random.split(key, 10)
    scale = 0.05
    n_half = n_hidden // 2

    def lin(kw, kb, fan_in, fan_out):
        w = scale * jax.random.normal(kw, (fan_in, fan_out), jnp.float32)
        b = scale * jax.random.normal(kb, (1, fan_out), jnp.float32)
        return w, b

    w1, b1 = lin(keys[0], keys[1], d_in, n_hidden)        # lin1
    w2, b2 = lin(keys[2], keys[3], n_hidden, n_hidden)    # lin2
    w3, b3 = lin(keys[4], keys[5], n_hidden, d_out)       # lin3
    w3f, b3f = lin(keys[6], keys[7], n_hidden, n_half)    # lin3_fea
    w4f, b4f = lin(keys[8], keys[9], n_half, n_embd)      # lin4_fea
    return (w1, b1, w2, b2, w3, b3, w3f, b3f, w4f, b4f)


def reference_forward(x, params):
    (w1, b1, w2, b2, w3, b3, w3f, b3f, w4f, b4f) = params
    r1 = jnp.maximum(x @ w1 + b1, 0.0)
    fea_h = r1 @ w2 + b2
    r2 = jnp.maximum(fea_h, 0.0)
    out = r2 @ w3 + b3
    fa = jnp.maximum(r2 @ w3f + b3f, 0.0)
    fea = jnp.tanh(fa @ w4f + b4f)
    return out, fea


if __name__ == "__main__":
    key = jax.random.PRNGKey(0)
    k_x, k_p = jax.random.split(key)

    # Small shapes consistent with the tabular MLP; B=500 exercises the >=2-step
    # "parallel" batch grid (v7x both-TC path) plus the remainder-padding path.
    B, d_in, d_out, n_hidden, n_embd = 500, 16, 4, 32, 64

    x = jax.random.normal(k_x, (B, d_in), jnp.float32)
    params = init_params(k_p, d_in, d_out, n_hidden, n_embd)

    logits, fea = mlp_tabular_forward(x, params)
    logits = jax.block_until_ready(logits)
    fea = jax.block_until_ready(fea)

    ref_out, ref_fea = reference_forward(x, params)
    assert logits.shape == (B, d_out) and fea.shape == (B, n_embd)
    # bf16 MXU feed + bf16 fea storage -> compare against the pure-f32 reference with
    # bf16-level tolerance.
    assert jnp.allclose(logits, ref_out, atol=2e-2, rtol=2e-2)
    assert jnp.allclose(fea.astype(jnp.float32), ref_fea, atol=2e-2, rtol=2e-2)

    print("KERNEL_OK")
</pallas_src>

<mosaic_0001>
module attributes {stable_mosaic.version = 11 : i64} {
  func.func @mlp_tabular_kernel(%arg0: i32, %arg1: memref<256x16xf32, #tpu.memory_space<vmem>>, %arg2: memref<16x128xbf16, #tpu.memory_space<vmem>>, %arg3: memref<1x128xf32, #tpu.memory_space<vmem>>, %arg4: memref<128x128xbf16, #tpu.memory_space<vmem>>, %arg5: memref<1x128xf32, #tpu.memory_space<vmem>>, %arg6: memref<128x128xbf16, #tpu.memory_space<vmem>>, %arg7: memref<1x128xf32, #tpu.memory_space<vmem>>, %arg8: memref<128x128xbf16, #tpu.memory_space<vmem>>, %arg9: memref<1x128xf32, #tpu.memory_space<vmem>>, %arg10: memref<256x4xf32, #tpu.memory_space<vmem>>, %arg11: memref<256x128xbf16, #tpu.memory_space<vmem>>) attributes {dimension_semantics = [#tpu.dimension_semantics<parallel>], iteration_bounds = array<i64: 2>, scalar_prefetch = 0 : i64, scratch_operands = 0 : i64, tpu.core_type = #tpu.core_type<tc>, window_params = [{transform_indices = @transform_0, window_bounds = array<i64: 256, 16>}, {pipeline_mode = #tpu.pipeline_mode<synchronous>, transform_indices = @transform_1, window_bounds = array<i64: 16, 128>}, {pipeline_mode = #tpu.pipeline_mode<synchronous>, transform_indices = @transform_2, window_bounds = array<i64: 1, 128>}, {pipeline_mode = #tpu.pipeline_mode<synchronous>, transform_indices = @transform_3, window_bounds = array<i64: 128, 128>}, {pipeline_mode = #tpu.pipeline_mode<synchronous>, transform_indices = @transform_4, window_bounds = array<i64: 1, 128>}, {pipeline_mode = #tpu.pipeline_mode<synchronous>, transform_indices = @transform_5, window_bounds = array<i64: 128, 128>}, {pipeline_mode = #tpu.pipeline_mode<synchronous>, transform_indices = @transform_6, window_bounds = array<i64: 1, 128>}, {pipeline_mode = #tpu.pipeline_mode<synchronous>, transform_indices = @transform_7, window_bounds = array<i64: 128, 128>}, {pipeline_mode = #tpu.pipeline_mode<synchronous>, transform_indices = @transform_8, window_bounds = array<i64: 1, 128>}, {transform_indices = @transform_9, window_bounds = array<i64: 256, 4>}, {transform_indices = @transform_10, window_bounds = array<i64: 256, 128>}]} {
    %c0 = arith.constant 0 : index
    %c0_0 = arith.constant 0 : index
    %0 = vector.load %arg1[%c0, %c0_0] : memref<256x16xf32, #tpu.memory_space<vmem>>, vector<256x16xf32>
    %1 = arith.truncf %0 : vector<256x16xf32> to vector<256x16xbf16>
    %c0_1 = arith.constant 0 : index
    %c0_2 = arith.constant 0 : index
    %2 = vector.load %arg2[%c0_1, %c0_2] : memref<16x128xbf16, #tpu.memory_space<vmem>>, vector<16x128xbf16>
    %cst = arith.constant dense<0.000000e+00> : vector<256x128xf32>
    %3 = tpu.matmul %1, %2, %cst {dimension_numbers = #tpu.dot_dimension_numbers<[1], [0], [0], [1], [0, 0, 1, 1], [], []>} : vector<256x16xbf16>, vector<16x128xbf16>, vector<256x128xf32> -> vector<256x128xf32>
    %c0_3 = arith.constant 0 : index
    %c0_4 = arith.constant 0 : index
    %4 = vector.load %arg3[%c0_3, %c0_4] : memref<1x128xf32, #tpu.memory_space<vmem>>, vector<1x128xf32>
    %5 = vector.broadcast %4 : vector<1x128xf32> to vector<256x128xf32>
    %6 = arith.addf %3, %5 : vector<256x128xf32>
    %cst_5 = arith.constant 0.000000e+00 : f32
    %7 = vector.broadcast %cst_5 : f32 to vector<256x128xf32>
    %8 = arith.maximumf %6, %7 : vector<256x128xf32>
    %9 = arith.truncf %8 : vector<256x128xf32> to vector<256x128xbf16>
    %c0_6 = arith.constant 0 : index
    %c0_7 = arith.constant 0 : index
    %10 = vector.load %arg4[%c0_6, %c0_7] : memref<128x128xbf16, #tpu.memory_space<vmem>>, vector<128x128xbf16>
    %cst_8 = arith.constant dense<0.000000e+00> : vector<256x128xf32>
    %11 = tpu.matmul %9, %10, %cst_8 {dimension_numbers = #tpu.dot_dimension_numbers<[1], [0], [0], [1], [0, 0, 1, 1], [], []>} : vector<256x128xbf16>, vector<128x128xbf16>, vector<256x128xf32> -> vector<256x128xf32>
    %c0_9 = arith.constant 0 : index
    %c0_10 = arith.constant 0 : index
    %12 = vector.load %arg5[%c0_9, %c0_10] : memref<1x128xf32, #tpu.memory_space<vmem>>, vector<1x128xf32>
    %13 = vector.broadcast %12 : vector<1x128xf32> to vector<256x128xf32>
    %14 = arith.addf %11, %13 : vector<256x128xf32>
    %cst_11 = arith.constant 0.000000e+00 : f32
    %15 = vector.broadcast %cst_11 : f32 to vector<256x128xf32>
    %16 = arith.maximumf %14, %15 : vector<256x128xf32>
    %17 = arith.truncf %16 : vector<256x128xf32> to vector<256x128xbf16>
    %c0_12 = arith.constant 0 : index
    %c0_13 = arith.constant 0 : index
    %18 = vector.load %arg6[%c0_12, %c0_13] : memref<128x128xbf16, #tpu.memory_space<vmem>>, vector<128x128xbf16>
    %cst_14 = arith.constant dense<0.000000e+00> : vector<256x128xf32>
    %19 = tpu.matmul %17, %18, %cst_14 {dimension_numbers = #tpu.dot_dimension_numbers<[1], [0], [0], [1], [0, 0, 1, 1], [], []>} : vector<256x128xbf16>, vector<128x128xbf16>, vector<256x128xf32> -> vector<256x128xf32>
    %c0_15 = arith.constant 0 : index
    %c0_16 = arith.constant 0 : index
    %20 = vector.load %arg7[%c0_15, %c0_16] : memref<1x128xf32, #tpu.memory_space<vmem>>, vector<1x128xf32>
    %21 = vector.broadcast %20 : vector<1x128xf32> to vector<256x128xf32>
    %22 = arith.addf %19, %21 : vector<256x128xf32>
    %23 = vector.extract_strided_slice %22 {offsets = [0, 0], sizes = [256, 4], strides = [1, 1]} : vector<256x128xf32> to vector<256x4xf32>
    %c0_17 = arith.constant 0 : index
    %c0_18 = arith.constant 0 : index
    %24 = vector.load %arg10[%c0_17, %c0_18] : memref<256x4xf32, #tpu.memory_space<vmem>>, vector<256x4xf32>
    tpu.vector_store %arg10[%c0_17, %c0_18], %23 {strides = array<i32>} : memref<256x4xf32, #tpu.memory_space<vmem>>, vector<256x4xf32>,
    %cst_19 = arith.constant 0.000000e+00 : f32
    %25 = vector.broadcast %cst_19 : f32 to vector<256x128xf32>
    %26 = arith.maximumf %22, %25 : vector<256x128xf32>
    %27 = arith.truncf %26 : vector<256x128xf32> to vector<256x128xbf16>
    %c0_20 = arith.constant 0 : index
    %c0_21 = arith.constant 0 : index
    %28 = vector.load %arg8[%c0_20, %c0_21] : memref<128x128xbf16, #tpu.memory_space<vmem>>, vector<128x128xbf16>
    %cst_22 = arith.constant dense<0.000000e+00> : vector<256x128xf32>
    %29 = tpu.matmul %27, %28, %cst_22 {dimension_numbers = #tpu.dot_dimension_numbers<[1], [0], [0], [1], [0, 0, 1, 1], [], []>} : vector<256x128xbf16>, vector<128x128xbf16>, vector<256x128xf32> -> vector<256x128xf32>
    %c0_23 = arith.constant 0 : index
    %c0_24 = arith.constant 0 : index
    %30 = vector.load %arg9[%c0_23, %c0_24] : memref<1x128xf32, #tpu.memory_space<vmem>>, vector<1x128xf32>
    %31 = vector.broadcast %30 : vector<1x128xf32> to vector<256x128xf32>
    %32 = arith.addf %29, %31 : vector<256x128xf32>
    %33 = math.tanh %32 : vector<256x128xf32>
    %34 = arith.truncf %33 : vector<256x128xf32> to vector<256x128xbf16>
    %c0_25 = arith.constant 0 : index
    %c0_26 = arith.constant 0 : index
    %35 = vector.load %arg11[%c0_25, %c0_26] : memref<256x128xbf16, #tpu.memory_space<vmem>>, vector<256x128xbf16>
    tpu.vector_store %arg11[%c0_25, %c0_26], %34 {strides = array<i32>} : memref<256x128xbf16, #tpu.memory_space<vmem>>, vector<256x128xbf16>,
    return
  }
  func.func @transform_0(%arg0: i32) -> (i32, i32) {
    %c0_i32 = arith.constant 0 : i32
    %c0_i32_0 = arith.constant 0 : i32
    return %arg0, %c0_i32 : i32, i32
  }
  func.func @transform_1(%arg0: i32) -> (i32, i32) {
    %c0_i32 = arith.constant 0 : i32
    %c0_i32_0 = arith.constant 0 : i32
    %c0_i32_1 = arith.constant 0 : i32
    return %c0_i32, %c0_i32_0 : i32, i32
  }
  func.func @transform_2(%arg0: i32) -> (i32, i32) {
    %c0_i32 = arith.constant 0 : i32
    %c0_i32_0 = arith.constant 0 : i32
    %c0_i32_1 = arith.constant 0 : i32
    return %c0_i32, %c0_i32_0 : i32, i32
  }
  func.func @transform_3(%arg0: i32) -> (i32, i32) {
    %c0_i32 = arith.constant 0 : i32
    %c0_i32_0 = arith.constant 0 : i32
    %c0_i32_1 = arith.constant 0 : i32
    return %c0_i32, %c0_i32_0 : i32, i32
  }
  func.func @transform_4(%arg0: i32) -> (i32, i32) {
    %c0_i32 = arith.constant 0 : i32
    %c0_i32_0 = arith.constant 0 : i32
    %c0_i32_1 = arith.constant 0 : i32
    return %c0_i32, %c0_i32_0 : i32, i32
  }
  func.func @transform_5(%arg0: i32) -> (i32, i32) {
    %c0_i32 = arith.constant 0 : i32
    %c0_i32_0 = arith.constant 0 : i32
    %c0_i32_1 = arith.constant 0 : i32
    return %c0_i32, %c0_i32_0 : i32, i32
  }
  func.func @transform_6(%arg0: i32) -> (i32, i32) {
    %c0_i32 = arith.constant 0 : i32
    %c0_i32_0 = arith.constant 0 : i32
    %c0_i32_1 = arith.constant 0 : i32
    return %c0_i32, %c0_i32_0 : i32, i32
  }
  func.func @transform_7(%arg0: i32) -> (i32, i32) {
    %c0_i32 = arith.constant 0 : i32
    %c0_i32_0 = arith.constant 0 : i32
    %c0_i32_1 = arith.constant 0 : i32
    return %c0_i32, %c0_i32_0 : i32, i32
  }
  func.func @transform_8(%arg0: i32) -> (i32, i32) {
    %c0_i32 = arith.constant 0 : i32
    %c0_i32_0 = arith.constant 0 : i32
    %c0_i32_1 = arith.constant 0 : i32
    return %c0_i32, %c0_i32_0 : i32, i32
  }
  func.func @transform_9(%arg0: i32) -> (i32, i32) {
    %c0_i32 = arith.constant 0 : i32
    %c0_i32_0 = arith.constant 0 : i32
    return %arg0, %c0_i32 : i32, i32
  }
  func.func @transform_10(%arg0: i32) -> (i32, i32) {
    %c0_i32 = arith.constant 0 : i32
    %c0_i32_0 = arith.constant 0 : i32
    return %arg0, %c0_i32 : i32, i32
  }
}

</mosaic_0001>

<llo_original>
// kernel: tpu_custom_call.1
$region0: #{tpu_custom_call.1}
  #allocation0 [shape = 'u32[]', space=smem, size = 0x4, offset = 0x4, fixed_abs, tag = 'smem constant byte address 0x4 - core index']
  #allocation1 [shape = 'u32[144,128]{1,0:T(1,128)}', space=vmem, size = 0x12000, scoped, tag = 'internal scratch']
  %s0 = inlined_call_operand.vmem [shape: f32[512,16], index: 0, kind: input, shape index: {}]
  %s1 = inlined_call_operand.vmem [shape: bf16[16,128], index: 1, kind: input, shape index: {}]
  %s2 = inlined_call_operand.vmem [shape: f32[1,128], index: 2, kind: input, shape index: {}]
  %s3 = inlined_call_operand.vmem [shape: bf16[128,128], index: 3, kind: input, shape index: {}]
  %s4 = inlined_call_operand.vmem [shape: f32[1,128], index: 4, kind: input, shape index: {}]
  %s5 = inlined_call_operand.vmem [shape: bf16[128,128], index: 5, kind: input, shape index: {}]
  %s6 = inlined_call_operand.vmem [shape: f32[1,128], index: 6, kind: input, shape index: {}]
  %s7 = inlined_call_operand.vmem [shape: bf16[128,128], index: 7, kind: input, shape index: {}]
  %s8 = inlined_call_operand.vmem [shape: f32[1,128], index: 8, kind: input, shape index: {}]
  %s9 = inlined_call_operand.vmem [shape: f32[512,4], index: 9, kind: output, shape index: {0}]
  %s10 = inlined_call_operand.hbm [shape: bf16[512,128], index: 10, kind: output, shape index: {1}]
  %11 = xla_tuple %s9, %s10
  %s12 = sld [smem:[#allocation0]]
  $region77: #{tpu_custom_call.1} parent=0
    _
  %s14 = ssub.s32 1, %s12
  %s15 = scalar_select 0, %s14, %s12
  $region1: #{tpu_custom_call.1} parent=0
    #allocation2 [shape = 'u8[131072]{0}', space=vmem, size = 0x20000, scoped, tag = 'output window, operand 1']
    #allocation3 [shape = 's32[2]{0}', space=sflag, size = 0x8, scoped, tag = 'scoped memory for tpu_custom_call.1']
    %16 = vsyncpa [#allocation3], 0
    %s17 = scalar_lea.sflag [#allocation3], 1
    %18 = vsyncpa %s17, 0
    loop: start=0, step=1, limit=4
    $region2: #{tpu_custom_call.1} parent=1 // loop_pre_header
      _
    $region3: #{tpu_custom_call.1} parent=1 // loop_header
      %s20 = sphi 0, %s24
      %p21 = scmp.ge.s32.totalorder %s20, 4
      %s30 = sphi 0, %s32
      %s33 = sphi 0, %s30
      %s34 = sphi 0, %s33
      %s50 = sphi 0, %s34
      %s54 = sphi 0, %s54
      %s56 = sphi 0, %s54
      %s57 = sphi 0, %s56
      %s71 = sphi 0, %s57
      %s75 = sphi 0, %s75
      %s77 = sphi 0, %s75
      %s78 = sphi 0, %s77
      %s92 = sphi 0, %s78
      %s96 = sphi 0, %s96
      %s98 = sphi 0, %s96
      %s99 = sphi 0, %s98
      %s113 = sphi 0, %s99
      %s117 = sphi 0, %s117
      %s119 = sphi 0, %s117
      %s120 = sphi 0, %s119
      %s134 = sphi 0, %s120
      %s138 = sphi 0, %s138
      %s140 = sphi 0, %s138
      %s141 = sphi 0, %s140
      %s155 = sphi 0, %s141
      %s159 = sphi 0, %s159
      %s161 = sphi 0, %s159
      %s162 = sphi 0, %s161
      %s176 = sphi 0, %s162
      %s180 = sphi 0, %s180
      %s182 = sphi 0, %s180
      %s183 = sphi 0, %s182
      %s197 = sphi 0, %s183
      %s201 = sphi 0, %s201
      %s203 = sphi 0, %s201
      %s204 = sphi 0, %s203
      %s218 = sphi 0, %s204
      %s224 = sphi 0, %s226
      %s227 = sphi 0, %s224
      %s228 = sphi 0, %s227
      %s244 = sphi 0, %s228
      %s250 = sphi 0, %s252
      %s253 = sphi 0, %s250
      %s254 = sphi 0, %s253
      %s270 = sphi 0, %s254
    $region4: #{tpu_custom_call.1} parent=1 // loop_header_branch
      %23 = sbr.rel (%p21) target = $region8
    $region5: #{tpu_custom_call.1} parent=1 // loop_body
      %s25 = ssub.s32 %s20, 1
      %s26 = ssub.s32 %s20, 2
      %s27 = sadd.s32 %s20, 1
      %s28 = ssub.s32 %s20, %s27
      %p29 = scmp.eq.s32.totalorder %s28, 0
      %s31 = sadd.s32 %s30, 1
      %s32 = scalar_select %p29, %s30, %s31
      %p35 = pneg %p29
      %p36 = scmp.eq.s32.totalorder %s20, 1
      %p37 = por %p35, %p36
      %p38 = scmp.ne.s32.totalorder %s30, %s33
      %p39 = scmp.eq.s32.totalorder %s20, 0
      %p40 = por %p38, %p39
      %p41 = scmp.ne.s32.totalorder %s30, %s33
      %p42 = scmp.eq.s32.totalorder %s25, 1
      %p43 = por %p41, %p42
      %p44 = scmp.ne.s32.totalorder %s33, %s34
      %p45 = scmp.eq.s32.totalorder %s25, 0
      %p46 = por %p44, %p45
      %p47 = scmp.ne.s32.totalorder %s33, %s34
      %p48 = scmp.eq.s32.totalorder %s26, 1
      %p49 = por %p47, %p48
      %p51 = scmp.ne.s32.totalorder %s34, %s50
      %p52 = scmp.eq.s32.totalorder %s26, 0
      %p53 = por %p51, %p52
      %s55 = sadd.s32 %s54, 1
      %p58 = scmp.eq.s32.totalorder %s20, 1
      %p59 = scmp.ne.s32.totalorder %s54, %s56
      %p60 = scmp.eq.s32.totalorder %s20, 0
      %p61 = por %p59, %p60
      %p62 = scmp.ne.s32.totalorder %s54, %s56
      %p63 = scmp.eq.s32.totalorder %s25, 1
      %p64 = por %p62, %p63
      %p65 = scmp.ne.s32.totalorder %s56, %s57
      %p66 = scmp.eq.s32.totalorder %s25, 0
      %p67 = por %p65, %p66
      %p68 = scmp.ne.s32.totalorder %s56, %s57
      %p69 = scmp.eq.s32.totalorder %s26, 1
      %p70 = por %p68, %p69
      %p72 = scmp.ne.s32.totalorder %s57, %s71
      %p73 = scmp.eq.s32.totalorder %s26, 0
      %p74 = por %p72, %p73
      %s76 = sadd.s32 %s75, 1
      %p79 = scmp.eq.s32.totalorder %s20, 1
      %p80 = scmp.ne.s32.totalorder %s75, %s77
      %p81 = scmp.eq.s32.totalorder %s20, 0
      %p82 = por %p80, %p81
      %p83 = scmp.ne.s32.totalorder %s75, %s77
      %p84 = scmp.eq.s32.totalorder %s25, 1
      %p85 = por %p83, %p84
      %p86 = scmp.ne.s32.totalorder %s77, %s78
      %p87 = scmp.eq.s32.totalorder %s25, 0
      %p88 = por %p86, %p87
      %p89 = scmp.ne.s32.totalorder %s77, %s78
      %p90 = scmp.eq.s32.totalorder %s26, 1
      %p91 = por %p89, %p90
      %p93 = scmp.ne.s32.totalorder %s78, %s92
      %p94 = scmp.eq.s32.totalorder %s26, 0
      %p95 = por %p93, %p94
      %s97 = sadd.s32 %s96, 1
      %p100 = scmp.eq.s32.totalorder %s20, 1
      %p101 = scmp.ne.s32.totalorder %s96, %s98
      %p102 = scmp.eq.s32.totalorder %s20, 0
      %p103 = por %p101, %p102
      %p104 = scmp.ne.s32.totalorder %s96, %s98
      %p105 = scmp.eq.s32.totalorder %s25, 1
      %p106 = por %p104, %p105
      %p107 = scmp.ne.s32.totalorder %s98, %s99
      %p108 = scmp.eq.s32.totalorder %s25, 0
      %p109 = por %p107, %p108
      %p110 = scmp.ne.s32.totalorder %s98, %s99
      %p111 = scmp.eq.s32.totalorder %s26, 1
      %p112 = por %p110, %p111
      %p114 = scmp.ne.s32.totalorder %s99, %s113
      %p115 = scmp.eq.s32.totalorder %s26, 0
      %p116 = por %p114, %p115
      %s118 = sadd.s32 %s117, 1
      %p121 = scmp.eq.s32.totalorder %s20, 1
      %p122 = scmp.ne.s32.totalorder %s117, %s119
      %p123 = scmp.eq.s32.totalorder %s20, 0
      %p124 = por %p122, %p123
      %p125 = scmp.ne.s32.totalorder %s117, %s119
      %p126 = scmp.eq.s32.totalorder %s25, 1
      %p127 = por %p125, %p126
      %p128 = scmp.ne.s32.totalorder %s119, %s120
      %p129 = scmp.eq.s32.totalorder %s25, 0
      %p130 = por %p128, %p129
      %p131 = scmp.ne.s32.totalorder %s119, %s120
      %p132 = scmp.eq.s32.totalorder %s26, 1
      %p133 = por %p131, %p132
      %p135 = scmp.ne.s32.totalorder %s120, %s134
      %p136 = scmp.eq.s32.totalorder %s26, 0
      %p137 = por %p135, %p136
      %s139 = sadd.s32 %s138, 1
      %p142 = scmp.eq.s32.totalorder %s20, 1
      %p143 = scmp.ne.s32.totalorder %s138, %s140
      %p144 = scmp.eq.s32.totalorder %s20, 0
      %p145 = por %p143, %p144
      %p146 = scmp.ne.s32.totalorder %s138, %s140
      %p147 = scmp.eq.s32.totalorder %s25, 1
      %p148 = por %p146, %p147
      %p149 = scmp.ne.s32.totalorder %s140, %s141
      %p150 = scmp.eq.s32.totalorder %s25, 0
      %p151 = por %p149, %p150
      %p152 = scmp.ne.s32.totalorder %s140, %s141
      %p153 = scmp.eq.s32.totalorder %s26, 1
      %p154 = por %p152, %p153
      %p156 = scmp.ne.s32.totalorder %s141, %s155
      %p157 = scmp.eq.s32.totalorder %s26, 0
      %p158 = por %p156, %p157
      %s160 = sadd.s32 %s159, 1
      %p163 = scmp.eq.s32.totalorder %s20, 1
      %p164 = scmp.ne.s32.totalorder %s159, %s161
      %p165 = scmp.eq.s32.totalorder %s20, 0
      %p166 = por %p164, %p165
      %p167 = scmp.ne.s32.totalorder %s159, %s161
      %p168 = scmp.eq.s32.totalorder %s25, 1
      %p169 = por %p167, %p168
      %p170 = scmp.ne.s32.totalorder %s161, %s162
      %p171 = scmp.eq.s32.totalorder %s25, 0
      %p172 = por %p170, %p171
      %p173 = scmp.ne.s32.totalorder %s161, %s162
      %p174 = scmp.eq.s32.totalorder %s26, 1
      %p175 = por %p173, %p174
      %p177 = scmp.ne.s32.totalorder %s162, %s176
      %p178 = scmp.eq.s32.totalorder %s26, 0
      %p179 = por %p177, %p178
      %s181 = sadd.s32 %s180, 1
      %p184 = scmp.eq.s32.totalorder %s20, 1
      %p185 = scmp.ne.s32.totalorder %s180, %s182
      %p186 = scmp.eq.s32.totalorder %s20, 0
      %p187 = por %p185, %p186
      %p188 = scmp.ne.s32.totalorder %s180, %s182
      %p189 = scmp.eq.s32.totalorder %s25, 1
      %p190 = por %p188, %p189
      %p191 = scmp.ne.s32.totalorder %s182, %s183
      %p192 = scmp.eq.s32.totalorder %s25, 0
      %p193 = por %p191, %p192
      %p194 = scmp.ne.s32.totalorder %s182, %s183
      %p195 = scmp.eq.s32.totalorder %s26, 1
      %p196 = por %p194, %p195
      %p198 = scmp.ne.s32.totalorder %s183, %s197
      %p199 = scmp.eq.s32.totalorder %s26, 0
      %p200 = por %p198, %p199
      %s202 = sadd.s32 %s201, 1
      %p205 = scmp.eq.s32.totalorder %s20, 1
      %p206 = scmp.ne.s32.totalorder %s201, %s203
      %p207 = scmp.eq.s32.totalorder %s20, 0
      %p208 = por %p206, %p207
      %p209 = scmp.ne.s32.totalorder %s201, %s203
      %p210 = scmp.eq.s32.totalorder %s25, 1
      %p211 = por %p209, %p210
      %p212 = scmp.ne.s32.totalorder %s203, %s204
      %p213 = scmp.eq.s32.totalorder %s25, 0
      %p214 = por %p212, %p213
      %p215 = scmp.ne.s32.totalorder %s203, %s204
      %p216 = scmp.eq.s32.totalorder %s26, 1
      %p217 = por %p215, %p216
      %p219 = scmp.ne.s32.totalorder %s204, %s218
      %p220 = scmp.eq.s32.totalorder %s26, 0
      %p221 = por %p219, %p220
      %s222 = ssub.s32 %s20, %s27
      %p223 = scmp.eq.s32.totalorder %s222, 0
      %s225 = sadd.s32 %s224, 1
      %s226 = scalar_select %p223, %s224, %s225
      %p229 = pneg %p223
      %p230 = scmp.eq.s32.totalorder %s20, 1
      %p231 = por %p229, %p230
      %p232 = scmp.ne.s32.totalorder %s224, %s227
      %p233 = scmp.eq.s32.totalorder %s20, 0
      %p234 = por %p232, %p233
      %p235 = scmp.ne.s32.totalorder %s224, %s227
      %p236 = scmp.eq.s32.totalorder %s25, 1
      %p237 = por %p235, %p236
      %p238 = scmp.ne.s32.totalorder %s227, %s228
      %p239 = scmp.eq.s32.totalorder %s25, 0
      %p240 = por %p238, %p239
      %p241 = scmp.ne.s32.totalorder %s227, %s228
      %p242 = scmp.eq.s32.totalorder %s26, 1
      %p243 = por %p241, %p242
      %p245 = scmp.ne.s32.totalorder %s228, %s244
      %p246 = scmp.eq.s32.totalorder %s26, 0
      %p247 = por %p245, %p246
      %s248 = ssub.s32 %s20, %s27
      %p249 = scmp.eq.s32.totalorder %s248, 0
      %s251 = sadd.s32 %s250, 1
      %s252 = scalar_select %p249, %s250, %s251
      %p255 = pneg %p249
      %p256 = scmp.eq.s32.totalorder %s20, 1
      %p257 = por %p255, %p256
      %p258 = scmp.ne.s32.totalorder %s250, %s253
      %p259 = scmp.eq.s32.totalorder %s20, 0
      %p260 = por %p258, %p259
      %p261 = scmp.ne.s32.totalorder %s250, %s253
      %p262 = scmp.eq.s32.totalorder %s25, 1
      %p263 = por %p261, %p262
      %p264 = scmp.ne.s32.totalorder %s253, %s254
      %p265 = scmp.eq.s32.totalorder %s25, 0
      %p266 = por %p264, %p265
      %p267 = scmp.ne.s32.totalorder %s253, %s254
      %p268 = scmp.eq.s32.totalorder %s26, 1
      %p269 = por %p267, %p268
      %p271 = scmp.ne.s32.totalorder %s254, %s270
      %p272 = scmp.eq.s32.totalorder %s26, 0
      %p273 = por %p271, %p272
      %p274 = scmp.le.s32.totalorder 1, %s20
      %p275 = scmp.lt.s32.totalorder %s20, 3
      %p276 = pnand %p274, %p275
      %p277 = pneg %p276
      // Predicated region
      $region9: #{tpu_custom_call.1} parent=5 // pred_check
        _
      $region10: #{tpu_custom_call.1} parent=5 // pred_check_branch
        %279 = sbr.rel (%p276) target = $region12
      $region11: #{tpu_custom_call.1} parent=5 // pred_region
        %s280 = ssub.s32 %s20, 1
        // Predicated region
        $region13: #{tpu_custom_call.1} parent=11 // pred_check
          %p281 = pneg %p67
        $region14: #{tpu_custom_call.1} parent=11 // pred_check_branch
          %283 = sbr.rel (%p281) target = $region16
        $region15: #{tpu_custom_call.1} parent=11 // pred_region
          _
        $region16: #{tpu_custom_call.1} parent=11 // pred_fallthru
          _
        // Predicated region
        $region17: #{tpu_custom_call.1} parent=11 // pred_check
          %p284 = pneg %p88
        $region18: #{tpu_custom_call.1} parent=11 // pred_check_branch
          %286 = sbr.rel (%p284) target = $region20
        $region19: #{tpu_custom_call.1} parent=11 // pred_region
          _
        $region20: #{tpu_custom_call.1} parent=11 // pred_fallthru
          _
        // Predicated region
        $region21: #{tpu_custom_call.1} parent=11 // pred_check
          %p287 = pneg %p109
        $region22: #{tpu_custom_call.1} parent=11 // pred_check_branch
          %289 = sbr.rel (%p287) target = $region24
        $region23: #{tpu_custom_call.1} parent=11 // pred_region
          _
        $region24: #{tpu_custom_call.1} parent=11 // pred_fallthru
          _
        // Predicated region
        $region25: #{tpu_custom_call.1} parent=11 // pred_check
          %p290 = pneg %p130
        $region26: #{tpu_custom_call.1} parent=11 // pred_check_branch
          %292 = sbr.rel (%p290) target = $region28
        $region27: #{tpu_custom_call.1} parent=11 // pred_region
          _
        $region28: #{tpu_custom_call.1} parent=11 // pred_fallthru
          _
        // Predicated region
        $region29: #{tpu_custom_call.1} parent=11 // pred_check
          %p293 = pneg %p151
        $region30: #{tpu_custom_call.1} parent=11 // pred_check_branch
          %295 = sbr.rel (%p293) target = $region32
        $region31: #{tpu_custom_call.1} parent=11 // pred_region
          _
        $region32: #{tpu_custom_call.1} parent=11 // pred_fallthru
          _
        // Predicated region
        $region33: #{tpu_custom_call.1} parent=11 // pred_check
          %p296 = pneg %p172
        $region34: #{tpu_custom_call.1} parent=11 // pred_check_branch
          %298 = sbr.rel (%p296) target = $region36
        $region35: #{tpu_custom_call.1} parent=11 // pred_region
          _
        $region36: #{tpu_custom_call.1} parent=11 // pred_fallthru
          _
        // Predicated region
        $region37: #{tpu_custom_call.1} parent=11 // pred_check
          %p299 = pneg %p193
        $region38: #{tpu_custom_call.1} parent=11 // pred_check_branch
          %301 = sbr.rel (%p299) target = $region40
        $region39: #{tpu_custom_call.1} parent=11 // pred_region
          _
        $region40: #{tpu_custom_call.1} parent=11 // pred_fallthru
          _
        // Predicated region
        $region41: #{tpu_custom_call.1} parent=11 // pred_check
          %p302 = pneg %p214
        $region42: #{tpu_custom_call.1} parent=11 // pred_check_branch
          %304 = sbr.rel (%p302) target = $region44
        $region43: #{tpu_custom_call.1} parent=11 // pred_region
          _
        $region44: #{tpu_custom_call.1} parent=11 // pred_fallthru
          _
      $region12: #{tpu_custom_call.1} parent=5 // pred_fallthru
        _
      %p305 = scmp.lt.s32.totalorder %s20, 2
      // Predicated region
      $region45: #{tpu_custom_call.1} parent=5 // pred_check
        %p306 = pneg %p305
      $region46: #{tpu_custom_call.1} parent=5 // pred_check_branch
        %308 = sbr.rel (%p306) target = $region48
      $region47: #{tpu_custom_call.1} parent=5 // pred_region
        // Predicated region
        $region49: #{tpu_custom_call.1} parent=47 // pred_check
          %p309 = pneg %p40
        $region50: #{tpu_custom_call.1} parent=47 // pred_check_branch
          %311 = sbr.rel (%p309) target = $region52
        $region51: #{tpu_custom_call.1} parent=47 // pred_region
          %s312 = smul.u32 32, %s20
          %p313 = scmp.lt.s32.totalorder %s312, 63
          %s314 = scalar_select %p313, %s312, 63
          %s315 = smul.addr %s314, 8
          %s316 = scalar_lea.vmem %s0, %s315
          %s317 = smul.u32 32, %s20
        $region52: #{tpu_custom_call.1} parent=47 // pred_fallthru
          _
      $region48: #{tpu_custom_call.1} parent=5 // pred_fallthru
        _
      %p318 = scmp.le.s32.totalorder 1, %s20
      %p319 = scmp.lt.s32.totalorder %s20, 3
      %p320 = pnand %p318, %p319
      %p321 = pneg %p320
      // Predicated region
      $region53: #{tpu_custom_call.1} parent=5 // pred_check
        _
      $region54: #{tpu_custom_call.1} parent=5 // pred_check_branch
        %323 = sbr.rel (%p320) target = $region56
      $region55: #{tpu_custom_call.1} parent=5 // pred_region
        %s324 = ssub.s32 %s20, 1
        %s325 = smul.u32 32, %s25
        %p326 = scmp.lt.s32.totalorder %s325, 63
        %s327 = scalar_select %p326, %s325, 63
        %s328 = smul.addr %s327, 8
        %s329 = scalar_lea.vmem %s0, %s328
        %p330 = pneg %p46
        %p331 = pneg %p43
        %p332 = pneg %p67
        %p333 = pneg %p64
        %p334 = pneg %p88
        %p335 = pneg %p85
        %p336 = pneg %p109
        %p337 = pneg %p106
        %p338 = pneg %p130
        %p339 = pneg %p127
        %p340 = pneg %p151
        %p341 = pneg %p148
        %p342 = pneg %p172
        %p343 = pneg %p169
        %p344 = pneg %p193
        %p345 = pneg %p190
        %p346 = pneg %p214
        %p347 = pneg %p211
        %p348 = pneg %p240
        %p349 = pneg %p237
        %s350 = smul.u32 32, %s25
        %p351 = scmp.lt.s32.totalorder %s350, 63
        %s352 = scalar_select %p351, %s350, 63
        %s353 = smul.addr %s352, 8
        %s354 = scalar_lea.vmem %s9, %s353
        %p355 = pneg %p266
        %p356 = pneg %p263
        %s357 = sand.u32 %s253, 1
        %s358 = scalar_lea.sflag [#allocation3], %s357
        %s359 = sand.u32 %s253, 1
        %s360 = smul.addr %s359, 128
        %s361 = scalar_lea.vmem [#allocation2], %s360
        %s362 = smul.u32 32, %s25
        %p363 = scmp.lt.s32.totalorder %s362, 63
        %s364 = scalar_select %p363, %s362, 63
        %s365 = smul.addr %s364, 8
        %s366 = scalar_lea.vmem %s0, %s365
        %s367 = smul.u32 32, %s25
        %s368 = smul.u32 32, %s25
        %p369 = scmp.lt.s32.totalorder %s368, 63
        %s370 = scalar_select %p369, %s368, 63
        %s371 = smul.addr %s370, 8
        %s372 = scalar_lea.vmem %s9, %s371
        %s373 = smul.u32 32, %s25
        %s374 = smul.u32 32, %s25
        %v376 = vld [vmem:[%s366] sm:$0xff]
        %v377 = vld [vmem:[%s366 + $0x8] sm:$0xff]
        %v378 = vld [vmem:[%s366 + $0x10] sm:$0xff]
        %v379 = vld [vmem:[%s366 + $0x18] sm:$0xff]
        %v380 = vld [vmem:[%s366 + $0x20] sm:$0xff]
        %v381 = vld [vmem:[%s366 + $0x28] sm:$0xff]
        %v382 = vld [vmem:[%s366 + $0x30] sm:$0xff]
        %v383 = vld [vmem:[%s366 + $0x38] sm:$0xff]
        %v384 = vld [vmem:[%s366 + $0x40] sm:$0xff]
        %v385 = vld [vmem:[%s366 + $0x48] sm:$0xff]
        %v386 = vld [vmem:[%s366 + $0x50] sm:$0xff]
        %v387 = vld [vmem:[%s366 + $0x58] sm:$0xff]
        %v388 = vld [vmem:[%s366 + $0x60] sm:$0xff]
        %v389 = vld [vmem:[%s366 + $0x68] sm:$0xff]
        %v390 = vld [vmem:[%s366 + $0x70] sm:$0xff]
        %v391 = vld [vmem:[%s366 + $0x78] sm:$0xff]
        %v392 = vld [vmem:[%s366 + $0x80] sm:$0xff]
        %v393 = vld [vmem:[%s366 + $0x88] sm:$0xff]
        %v394 = vld [vmem:[%s366 + $0x90] sm:$0xff]
        %v395 = vld [vmem:[%s366 + $0x98] sm:$0xff]
        %v396 = vld [vmem:[%s366 + $0xa0] sm:$0xff]
        %v397 = vld [vmem:[%s366 + $0xa8] sm:$0xff]
        %v398 = vld [vmem:[%s366 + $0xb0] sm:$0xff]
        %v399 = vld [vmem:[%s366 + $0xb8] sm:$0xff]
        %v400 = vld [vmem:[%s366 + $0xc0] sm:$0xff]
        %v401 = vld [vmem:[%s366 + $0xc8] sm:$0xff]
        %v402 = vld [vmem:[%s366 + $0xd0] sm:$0xff]
        %v403 = vld [vmem:[%s366 + $0xd8] sm:$0xff]
        %v404 = vld [vmem:[%s366 + $0xe0] sm:$0xff]
        %v405 = vld [vmem:[%s366 + $0xe8] sm:$0xff]
        %v406 = vld [vmem:[%s366 + $0xf0] sm:$0xff]
        %v407 = vld [vmem:[%s366 + $0xf8] sm:$0xff]
        %v408 = vpack.c.bf16 %v377, %v376
        %v409 = vpack.c.bf16 %v379, %v378
        %v410 = vpack.c.bf16 %v381, %v380
        %v411 = vpack.c.bf16 %v383, %v382
        %v412 = vpack.c.bf16 %v385, %v384
        %v413 = vpack.c.bf16 %v387, %v386
        %v414 = vpack.c.bf16 %v389, %v388
        %v415 = vpack.c.bf16 %v391, %v390
        %v416 = vpack.c.bf16 %v393, %v392
        %v417 = vpack.c.bf16 %v395, %v394
        %v418 = vpack.c.bf16 %v397, %v396
        %v419 = vpack.c.bf16 %v399, %v398
        %v420 = vpack.c.bf16 %v401, %v400
        %v421 = vpack.c.bf16 %v403, %v402
        %v422 = vpack.c.bf16 %v405, %v404
        %v423 = vpack.c.bf16 %v407, %v406
        %v424 = vld [vmem:[%s1] sm:$0xf]
        %v425 = vld [vmem:[%s1 + $0x4] sm:$0xf]
        %v426 = vld [vmem:[%s2] sm:$0x1]
        %v428 = vlaneseq
        %v429 = vshrl.u32 %v428, 7
        %v430 = vsub.s32 0, %v429
        %v431 = vrot.slane %v426, %v430
        %v435 = vunpack.c.l.b16 %v424
        %v436 = vunpack.c.l.b16 %v425
        %v437 = vpack.c.b16 %v436, %v435
        %vm439 = vcmask 130048
        %v441 = vsel %vm439, %v408, 0
        %v444 = vsel %vm439, %v409, 0
        %v447 = vsel %vm439, %v410, 0
        %v450 = vsel %vm439, %v411, 0
        %v453 = vsel %vm439, %v412, 0
        %v456 = vsel %vm439, %v413, 0
        %v459 = vsel %vm439, %v414, 0
        %v462 = vsel %vm439, %v415, 0
        %v465 = vsel %vm439, %v416, 0
        %v468 = vsel %vm439, %v417, 0
        %v471 = vsel %vm439, %v418, 0
        %v474 = vsel %vm439, %v419, 0
        %v477 = vsel %vm439, %v420, 0
        %v480 = vsel %vm439, %v421, 0
        %v483 = vsel %vm439, %v422, 0
        %v486 = vsel %vm439, %v423, 0
        %488 = vmatprep.subr.bf16.mxu0 0
        %489 = vmatpush1.bf16.msra.mxu0 %v437
        %490 = vmatprep.subr.bf16.mxu0 0
        %491 = vmatpush1.bf16.msra.mxu0 0
        %492 = vmatprep.subr.bf16.mxu0 0
        %493 = vmatpush1.bf16.msra.mxu0 0
        %494 = vmatprep.subr.bf16.mxu0 0
        %495 = vmatpush1.bf16.msra.mxu0 0
        %496 = vmatprep.subr.bf16.mxu0 0
        %497 = vmatpush1.bf16.msra.mxu0 0
        %498 = vmatprep.subr.bf16.mxu0 0
        %499 = vmatpush1.bf16.msra.mxu0 0
        %500 = vmatprep.subr.bf16.mxu0 0
        %501 = vmatpush1.bf16.msra.mxu0 0
        %502 = vmatprep.subr.bf16.mxu0 0
        %503 = vmatpush1.bf16.msra.mxu0 0
        %504 = vmatprep.subr.bf16.mxu0 0
        %505 = vmatpush1.bf16.msra.mxu0 0
        %506 = vmatprep.subr.bf16.mxu0 0
        %507 = vmatpush1.bf16.msra.mxu0 0
        %508 = vmatprep.subr.bf16.mxu0 0
        %509 = vmatpush1.bf16.msra.mxu0 0
        %510 = vmatprep.subr.bf16.mxu0 0
        %511 = vmatpush1.bf16.msra.mxu0 0
        %512 = vmatprep.subr.bf16.mxu0 0
        %513 = vmatpush1.bf16.msra.mxu0 0
        %514 = vmatprep.subr.bf16.mxu0 0
        %515 = vmatpush1.bf16.msra.mxu0 0
        %516 = vmatprep.subr.bf16.mxu0 0
        %517 = vmatpush1.bf16.msra.mxu0 0
        %518 = vmatprep.subr.bf16.mxu0 0
        %519 = vmatpush1.bf16.msra.mxu0 0
        %520 = vmatprep.mubr.bf16.mxu0 0
        %521 = vmatmul.mubr.bf16.gmra.mrb[0].mxu0 %v441
        %v522 = vpop.f32.mrb[0].mxu0
        %v523 = vadd.f32 %v431, %v522
        %v524 = vpop.f32.mrb[0].mxu0
        %v525 = vpop.f32.mrb[0].mxu0
        %v526 = vadd.f32 %v431, %v525
        %v527 = vpop.f32.mrb[0].mxu0
        %528 = vmatprep.mubr.bf16.mxu0 0
        %529 = vmatmul.mubr.bf16.gmra.mrb[0].mxu0 %v444
        %v530 = vpop.f32.mrb[0].mxu0
        %v531 = vadd.f32 %v431, %v530
        %v532 = vpop.f32.mrb[0].mxu0
        %v533 = vpop.f32.mrb[0].mxu0
        %v534 = vadd.f32 %v431, %v533
        %v535 = vpop.f32.mrb[0].mxu0
        %536 = vmatprep.mubr.bf16.mxu0 0
        %537 = vmatmul.mubr.bf16.gmra.mrb[0].mxu0 %v447
        %v538 = vpop.f32.mrb[0].mxu0
        %v539 = vadd.f32 %v431, %v538
        %v540 = vpop.f32.mrb[0].mxu0
        %v541 = vpop.f32.mrb[0].mxu0
        %v542 = vadd.f32 %v431, %v541
        %v543 = vpop.f32.mrb[0].mxu0
        %544 = vmatprep.mubr.bf16.mxu0 0
        %545 = vmatmul.mubr.bf16.gmra.mrb[0].mxu0 %v450
        %v546 = vpop.f32.mrb[0].mxu0
        %v547 = vadd.f32 %v431, %v546
        %v548 = vpop.f32.mrb[0].mxu0
        %v549 = vpop.f32.mrb[0].mxu0
        %v550 = vadd.f32 %v431, %v549
        %v551 = vpop.f32.mrb[0].mxu0
        %552 = vmatprep.mubr.bf16.mxu0 0
        %553 = vmatmul.mubr.bf16.gmra.mrb[0].mxu0 %v453
        %v554 = vpop.f32.mrb[0].mxu0
        %v555 = vadd.f32 %v431, %v554
        %v556 = vpop.f32.mrb[0].mxu0
        %v557 = vpop.f32.mrb[0].mxu0
        %v558 = vadd.f32 %v431, %v557
        %v559 = vpop.f32.mrb[0].mxu0
        %560 = vmatprep.mubr.bf16.mxu0 0
        %561 = vmatmul.mubr.bf16.gmra.mrb[0].mxu0 %v456
        %v562 = vpop.f32.mrb[0].mxu0
        %v563 = vadd.f32 %v431, %v562
        %v564 = vpop.f32.mrb[0].mxu0
        %v565 = vpop.f32.mrb[0].mxu0
        %v566 = vadd.f32 %v431, %v565
        %v567 = vpop.f32.mrb[0].mxu0
        %568 = vmatprep.mubr.bf16.mxu0 0
        %569 = vmatmul.mubr.bf16.gmra.mrb[0].mxu0 %v459
        %v570 = vpop.f32.mrb[0].mxu0
        %v571 = vadd.f32 %v431, %v570
        %v572 = vpop.f32.mrb[0].mxu0
        %v573 = vpop.f32.mrb[0].mxu0
        %v574 = vadd.f32 %v431, %v573
        %v575 = vpop.f32.mrb[0].mxu0
        %576 = vmatprep.mubr.bf16.mxu0 0
        %577 = vmatmul.mubr.bf16.gmra.mrb[0].mxu0 %v462
        %v578 = vpop.f32.mrb[0].mxu0
        %v579 = vadd.f32 %v431, %v578
        %v580 = vpop.f32.mrb[0].mxu0
        %v581 = vpop.f32.mrb[0].mxu0
        %v582 = vadd.f32 %v431, %v581
        %v583 = vpop.f32.mrb[0].mxu0
        %584 = vmatprep.mubr.bf16.mxu0 0
        %585 = vmatmul.mubr.bf16.gmra.mrb[0].mxu0 %v465
        %v586 = vpop.f32.mrb[0].mxu0
        %v587 = vadd.f32 %v431, %v586
        %v588 = vpop.f32.mrb[0].mxu0
        %v589 = vpop.f32.mrb[0].mxu0
        %v590 = vadd.f32 %v431, %v589
        %v591 = vpop.f32.mrb[0].mxu0
        %592 = vmatprep.mubr.bf16.mxu0 0
        %593 = vmatmul.mubr.bf16.gmra.mrb[0].mxu0 %v468
        %v594 = vpop.f32.mrb[0].mxu0
        %v595 = vadd.f32 %v431, %v594
        %v596 = vpop.f32.mrb[0].mxu0
        %v597 = vpop.f32.mrb[0].mxu0
        %v598 = vadd.f32 %v431, %v597
        %v599 = vpop.f32.mrb[0].mxu0
        %600 = vmatprep.mubr.bf16.mxu0 0
        %601 = vmatmul.mubr.bf16.gmra.mrb[0].mxu0 %v471
        %v602 = vpop.f32.mrb[0].mxu0
        %v603 = vadd.f32 %v431, %v602
        %v604 = vpop.f32.mrb[0].mxu0
        %v605 = vpop.f32.mrb[0].mxu0
        %v606 = vadd.f32 %v431, %v605
        %v607 = vpop.f32.mrb[0].mxu0
        %608 = vmatprep.mubr.bf16.mxu0 0
        %609 = vmatmul.mubr.bf16.gmra.mrb[0].mxu0 %v474
        %v610 = vpop.f32.mrb[0].mxu0
        %v611 = vadd.f32 %v431, %v610
        %v612 = vpop.f32.mrb[0].mxu0
        %v613 = vpop.f32.mrb[0].mxu0
        %v614 = vadd.f32 %v431, %v613
        %v615 = vpop.f32.mrb[0].mxu0
        %616 = vmatprep.mubr.bf16.mxu0 0
        %617 = vmatmul.mubr.bf16.gmra.mrb[0].mxu0 %v477
        %v618 = vpop.f32.mrb[0].mxu0
        %v619 = vadd.f32 %v431, %v618
        %v620 = vpop.f32.mrb[0].mxu0
        %v621 = vpop.f32.mrb[0].mxu0
        %v622 = vadd.f32 %v431, %v621
        %v623 = vpop.f32.mrb[0].mxu0
        %624 = vmatprep.mubr.bf16.mxu0 0
        %625 = vmatmul.mubr.bf16.gmra.mrb[0].mxu0 %v480
        %v626 = vpop.f32.mrb[0].mxu0
        %v627 = vadd.f32 %v431, %v626
        %v628 = vpop.f32.mrb[0].mxu0
        %v629 = vpop.f32.mrb[0].mxu0
        %v630 = vadd.f32 %v431, %v629
        %v631 = vpop.f32.mrb[0].mxu0
        %632 = vmatprep.mubr.bf16.mxu0 0
        %633 = vmatmul.mubr.bf16.gmra.mrb[0].mxu0 %v483
        %v634 = vpop.f32.mrb[0].mxu0
        %v635 = vadd.f32 %v431, %v634
        %v636 = vpop.f32.mrb[0].mxu0
        %v637 = vpop.f32.mrb[0].mxu0
        %v638 = vadd.f32 %v431, %v637
        %v639 = vpop.f32.mrb[0].mxu0
        %640 = vmatprep.mubr.bf16.mxu0 0
        %641 = vmatmul.mubr.bf16.gmra.mrb[0].mxu0 %v486
        %v642 = vpop.f32.mrb[0].mxu0
        %v643 = vadd.f32 %v431, %v642
        %v644 = vpop.f32.mrb[0].mxu0
        %v645 = vpop.f32.mrb[0].mxu0
        %v646 = vadd.f32 %v431, %v645
        %v647 = vpop.f32.mrb[0].mxu0
        %648 = vdwg.mxu0
        %v649 = vmax.f32 %v523, 0.0
        %v650 = vmax.f32 %v526, 0.0
        %v651 = vmax.f32 %v531, 0.0
        %v652 = vmax.f32 %v534, 0.0
        %v653 = vmax.f32 %v539, 0.0
        %v654 = vmax.f32 %v542, 0.0
        %v655 = vmax.f32 %v547, 0.0
        %v656 = vmax.f32 %v550, 0.0
        %v657 = vmax.f32 %v555, 0.0
        %v658 = vmax.f32 %v558, 0.0
        %v659 = vmax.f32 %v563, 0.0
        %v660 = vmax.f32 %v566, 0.0
        %v661 = vmax.f32 %v571, 0.0
        %v662 = vmax.f32 %v574, 0.0
        %v663 = vmax.f32 %v579, 0.0
        %v664 = vmax.f32 %v582, 0.0
        %v665 = vmax.f32 %v587, 0.0
        %v666 = vmax.f32 %v590, 0.0
        %v667 = vmax.f32 %v595, 0.0
        %v668 = vmax.f32 %v598, 0.0
        %v669 = vmax.f32 %v603, 0.0
        %v670 = vmax.f32 %v606, 0.0
        %v671 = vmax.f32 %v611, 0.0
        %v672 = vmax.f32 %v614, 0.0
        %v673 = vmax.f32 %v619, 0.0
        %v674 = vmax.f32 %v622, 0.0
        %v675 = vmax.f32 %v627, 0.0
        %v676 = vmax.f32 %v630, 0.0
        %v677 = vmax.f32 %v635, 0.0
        %v678 = vmax.f32 %v638, 0.0
        %v679 = vmax.f32 %v643, 0.0
        %v680 = vmax.f32 %v646, 0.0
        %v681 = vpack.c.bf16 %v650, %v649
        %v682 = vpack.c.bf16 %v652, %v651
        %v683 = vpack.c.bf16 %v654, %v653
        %v684 = vpack.c.bf16 %v656, %v655
        %v685 = vpack.c.bf16 %v658, %v657
        %v686 = vpack.c.bf16 %v660, %v659
        %v687 = vpack.c.bf16 %v662, %v661
        %v688 = vpack.c.bf16 %v664, %v663
        %v689 = vpack.c.bf16 %v666, %v665
        %v690 = vpack.c.bf16 %v668, %v667
        %v691 = vpack.c.bf16 %v670, %v669
        %v692 = vpack.c.bf16 %v672, %v671
        %v693 = vpack.c.bf16 %v674, %v673
        %v694 = vpack.c.bf16 %v676, %v675
        %v695 = vpack.c.bf16 %v678, %v677
        %v696 = vpack.c.bf16 %v680, %v679
        %v697 = vld [vmem:[%s3] sm:$0xf]
        %v698 = vld [vmem:[%s3 + $0x4] sm:$0xf]
        %v699 = vld [vmem:[%s3 + $0x8] sm:$0xf]
        %v700 = vld [vmem:[%s3 + $0xc] sm:$0xf]
        %v701 = vld [vmem:[%s3 + $0x10] sm:$0xf]
        %v702 = vld [vmem:[%s3 + $0x14] sm:$0xf]
        %v703 = vld [vmem:[%s3 + $0x18] sm:$0xf]
        %v704 = vld [vmem:[%s3 + $0x1c] sm:$0xf]
        %v705 = vld [vmem:[%s3 + $0x20] sm:$0xf]
        %v706 = vld [vmem:[%s3 + $0x24] sm:$0xf]
        %v707 = vld [vmem:[%s3 + $0x28] sm:$0xf]
        %v708 = vld [vmem:[%s3 + $0x2c] sm:$0xf]
        %v709 = vld [vmem:[%s3 + $0x30] sm:$0xf]
        %v710 = vld [vmem:[%s3 + $0x34] sm:$0xf]
        %v711 = vld [vmem:[%s3 + $0x38] sm:$0xf]
        %v712 = vld [vmem:[%s3 + $0x3c] sm:$0xf]
        %v713 = vld [vmem:[%s4] sm:$0x1]
        %v715 = vlaneseq
        %v716 = vshrl.u32 %v715, 7
        %v717 = vsub.s32 0, %v716
        %v718 = vrot.slane %v713, %v717
        %v736 = vunpack.c.l.b16 %v697
        %v737 = vunpack.c.l.b16 %v698
        %v738 = vunpack.c.l.b16 %v699
        %v739 = vunpack.c.l.b16 %v700
        %v740 = vunpack.c.l.b16 %v701
        %v741 = vunpack.c.l.b16 %v702
        %v742 = vunpack.c.l.b16 %v703
        %v743 = vunpack.c.l.b16 %v704
        %v744 = vunpack.c.l.b16 %v705
        %v745 = vunpack.c.l.b16 %v706
        %v746 = vunpack.c.l.b16 %v707
        %v747 = vunpack.c.l.b16 %v708
        %v748 = vunpack.c.l.b16 %v709
        %v749 = vunpack.c.l.b16 %v710
        %v750 = vunpack.c.l.b16 %v711
        %v751 = vunpack.c.l.b16 %v712
        %v752 = vpack.c.b16 %v737, %v736
        %v753 = vpack.c.b16 %v739, %v738
        %v754 = vpack.c.b16 %v741, %v740
        %v755 = vpack.c.b16 %v743, %v742
        %v756 = vpack.c.b16 %v745, %v744
        %v757 = vpack.c.b16 %v747, %v746
        %v758 = vpack.c.b16 %v749, %v748
        %v759 = vpack.c.b16 %v751, %v750
        %768 = vmatprep.subr.bf16.mxu0 0
        %769 = vmatpush1.bf16.msra.mxu0 %v752
        %770 = vmatprep.subr.bf16.mxu0 0
        %771 = vmatpush1.bf16.msra.mxu0 %v753
        %772 = vmatprep.subr.bf16.mxu0 0
        %773 = vmatpush1.bf16.msra.mxu0 %v754
        %774 = vmatprep.subr.bf16.mxu0 0
        %775 = vmatpush1.bf16.msra.mxu0 %v755
        %776 = vmatprep.subr.bf16.mxu0 0
        %777 = vmatpush1.bf16.msra.mxu0 %v756
        %778 = vmatprep.subr.bf16.mxu0 0
        %779 = vmatpush1.bf16.msra.mxu0 %v757
        %780 = vmatprep.subr.bf16.mxu0 0
        %781 = vmatpush1.bf16.msra.mxu0 %v758
        %782 = vmatprep.subr.bf16.mxu0 0
        %783 = vmatpush1.bf16.msra.mxu0 %v759
        %784 = vmatprep.subr.bf16.mxu0 0
        %785 = vmatpush1.bf16.msra.mxu0 0
        %786 = vmatprep.subr.bf16.mxu0 0
        %787 = vmatpush1.bf16.msra.mxu0 0
        %788 = vmatprep.subr.bf16.mxu0 0
        %789 = vmatpush1.bf16.msra.mxu0 0
        %790 = vmatprep.subr.bf16.mxu0 0
        %791 = vmatpush1.bf16.msra.mxu0 0
        %792 = vmatprep.subr.bf16.mxu0 0
        %793 = vmatpush1.bf16.msra.mxu0 0
        %794 = vmatprep.subr.bf16.mxu0 0
        %795 = vmatpush1.bf16.msra.mxu0 0
        %796 = vmatprep.subr.bf16.mxu0 0
        %797 = vmatpush1.bf16.msra.mxu0 0
        %798 = vmatprep.subr.bf16.mxu0 0
        %799 = vmatpush1.bf16.msra.mxu0 0
        %800 = vmatprep.mubr.bf16.mxu0 0
        %801 = vmatmul.mubr.bf16.gmra.mrb[0].mxu0 %v681
        %v802 = vpop.f32.mrb[0].mxu0
        %v803 = vadd.f32 %v718, %v802
        %v804 = vpop.f32.mrb[0].mxu0
        %v805 = vpop.f32.mrb[0].mxu0
        %v806 = vadd.f32 %v718, %v805
        %v807 = vpop.f32.mrb[0].mxu0
        %808 = vmatprep.mubr.bf16.mxu0 0
        %809 = vmatmul.mubr.bf16.gmra.mrb[0].mxu0 %v682
        %v810 = vpop.f32.mrb[0].mxu0
        %v811 = vadd.f32 %v718, %v810
        %v812 = vpop.f32.mrb[0].mxu0
        %v813 = vpop.f32.mrb[0].mxu0
        %v814 = vadd.f32 %v718, %v813
        %v815 = vpop.f32.mrb[0].mxu0
        %816 = vmatprep.mubr.bf16.mxu0 0
        %817 = vmatmul.mubr.bf16.gmra.mrb[0].mxu0 %v683
        %v818 = vpop.f32.mrb[0].mxu0
        %v819 = vadd.f32 %v718, %v818
        %v820 = vpop.f32.mrb[0].mxu0
        %v821 = vpop.f32.mrb[0].mxu0
        %v822 = vadd.f32 %v718, %v821
        %v823 = vpop.f32.mrb[0].mxu0
        %824 = vmatprep.mubr.bf16.mxu0 0
        %825 = vmatmul.mubr.bf16.gmra.mrb[0].mxu0 %v684
        %v826 = vpop.f32.mrb[0].mxu0
        %v827 = vadd.f32 %v718, %v826
        %v828 = vpop.f32.mrb[0].mxu0
        %v829 = vpop.f32.mrb[0].mxu0
        %v830 = vadd.f32 %v718, %v829
        %v831 = vpop.f32.mrb[0].mxu0
        %832 = vmatprep.mubr.bf16.mxu0 0
        %833 = vmatmul.mubr.bf16.gmra.mrb[0].mxu0 %v685
        %v834 = vpop.f32.mrb[0].mxu0
        %v835 = vadd.f32 %v718, %v834
        %v836 = vpop.f32.mrb[0].mxu0
        %v837 = vpop.f32.mrb[0].mxu0
        %v838 = vadd.f32 %v718, %v837
        %v839 = vpop.f32.mrb[0].mxu0
        %840 = vmatprep.mubr.bf16.mxu0 0
        %841 = vmatmul.mubr.bf16.gmra.mrb[0].mxu0 %v686
        %v842 = vpop.f32.mrb[0].mxu0
        %v843 = vadd.f32 %v718, %v842
        %v844 = vpop.f32.mrb[0].mxu0
        %v845 = vpop.f32.mrb[0].mxu0
        %v846 = vadd.f32 %v718, %v845
        %v847 = vpop.f32.mrb[0].mxu0
        %848 = vmatprep.mubr.bf16.mxu0 0
        %849 = vmatmul.mubr.bf16.gmra.mrb[0].mxu0 %v687
        %v850 = vpop.f32.mrb[0].mxu0
        %v851 = vadd.f32 %v718, %v850
        %v852 = vpop.f32.mrb[0].mxu0
        %v853 = vpop.f32.mrb[0].mxu0
        %v854 = vadd.f32 %v718, %v853
        %v855 = vpop.f32.mrb[0].mxu0
        %856 = vmatprep.mubr.bf16.mxu0 0
        %857 = vmatmul.mubr.bf16.gmra.mrb[0].mxu0 %v688
        %v858 = vpop.f32.mrb[0].mxu0
        %v859 = vadd.f32 %v718, %v858
        %v860 = vpop.f32.mrb[0].mxu0
        %v861 = vpop.f32.mrb[0].mxu0
        %v862 = vadd.f32 %v718, %v861
        %v863 = vpop.f32.mrb[0].mxu0
        %864 = vmatprep.mubr.bf16.mxu0 0
        %865 = vmatmul.mubr.bf16.gmra.mrb[0].mxu0 %v689
        %v866 = vpop.f32.mrb[0].mxu0
        %v867 = vadd.f32 %v718, %v866
        %v868 = vpop.f32.mrb[0].mxu0
        %v869 = vpop.f32.mrb[0].mxu0
        %v870 = vadd.f32 %v718, %v869
        %v871 = vpop.f32.mrb[0].mxu0
        %872 = vmatprep.mubr.bf16.mxu0 0
        %873 = vmatmul.mubr.bf16.gmra.mrb[0].mxu0 %v690
        %v874 = vpop.f32.mrb[0].mxu0
        %v875 = vadd.f32 %v718, %v874
        %v876 = vpop.f32.mrb[0].mxu0
        %v877 = vpop.f32.mrb[0].mxu0
        %v878 = vadd.f32 %v718, %v877
        %v879 = vpop.f32.mrb[0].mxu0
        %880 = vmatprep.mubr.bf16.mxu0 0
        %881 = vmatmul.mubr.bf16.gmra.mrb[0].mxu0 %v691
        %v882 = vpop.f32.mrb[0].mxu0
        %v883 = vadd.f32 %v718, %v882
        %v884 = vpop.f32.mrb[0].mxu0
        %v885 = vpop.f32.mrb[0].mxu0
        %v886 = vadd.f32 %v718, %v885
        %v887 = vpop.f32.mrb[0].mxu0
        %888 = vmatprep.mubr.bf16.mxu0 0
        %889 = vmatmul.mubr.bf16.gmra.mrb[0].mxu0 %v692
        %v890 = vpop.f32.mrb[0].mxu0
        %v891 = vadd.f32 %v718, %v890
        %v892 = vpop.f32.mrb[0].mxu0
        %v893 = vpop.f32.mrb[0].mxu0
        %v894 = vadd.f32 %v718, %v893
        %v895 = vpop.f32.mrb[0].mxu0
        %896 = vmatprep.mubr.bf16.mxu0 0
        %897 = vmatmul.mubr.bf16.gmra.mrb[0].mxu0 %v693
        %v898 = vpop.f32.mrb[0].mxu0
        %v899 = vadd.f32 %v718, %v898
        %v900 = vpop.f32.mrb[0].mxu0
        %v901 = vpop.f32.mrb[0].mxu0
        %v902 = vadd.f32 %v718, %v901
        %v903 = vpop.f32.mrb[0].mxu0
        %904 = vmatprep.mubr.bf16.mxu0 0
        %905 = vmatmul.mubr.bf16.gmra.mrb[0].mxu0 %v694
        %v906 = vpop.f32.mrb[0].mxu0
        %v907 = vadd.f32 %v718, %v906
        %v908 = vpop.f32.mrb[0].mxu0
        %v909 = vpop.f32.mrb[0].mxu0
        %v910 = vadd.f32 %v718, %v909
        %v911 = vpop.f32.mrb[0].mxu0
        %912 = vmatprep.mubr.bf16.mxu0 0
        %913 = vmatmul.mubr.bf16.gmra.mrb[0].mxu0 %v695
        %v914 = vpop.f32.mrb[0].mxu0
        %v915 = vadd.f32 %v718, %v914
        %v916 = vpop.f32.mrb[0].mxu0
        %v917 = vpop.f32.mrb[0].mxu0
        %v918 = vadd.f32 %v718, %v917
        %v919 = vpop.f32.mrb[0].mxu0
        %920 = vmatprep.mubr.bf16.mxu0 0
        %921 = vmatmul.mubr.bf16.gmra.mrb[0].mxu0 %v696
        %v922 = vpop.f32.mrb[0].mxu0
        %v923 = vadd.f32 %v718, %v922
        %v924 = vpop.f32.mrb[0].mxu0
        %v925 = vpop.f32.mrb[0].mxu0
        %v926 = vadd.f32 %v718, %v925
        %v927 = vpop.f32.mrb[0].mxu0
        %928 = vdwg.mxu0
        %v929 = vmax.f32 %v803, 0.0
        %v930 = vmax.f32 %v806, 0.0
        %v931 = vmax.f32 %v811, 0.0
        %v932 = vmax.f32 %v814, 0.0
        %v933 = vmax.f32 %v819, 0.0
        %v934 = vmax.f32 %v822, 0.0
        %v935 = vmax.f32 %v827, 0.0
        %v936 = vmax.f32 %v830, 0.0
        %v937 = vmax.f32 %v835, 0.0
        %v938 = vmax.f32 %v838, 0.0
        %v939 = vmax.f32 %v843, 0.0
        %v940 = vmax.f32 %v846, 0.0
        %v941 = vmax.f32 %v851, 0.0
        %v942 = vmax.f32 %v854, 0.0
        %v943 = vmax.f32 %v859, 0.0
        %v944 = vmax.f32 %v862, 0.0
        %v945 = vmax.f32 %v867, 0.0
        %v946 = vmax.f32 %v870, 0.0
        %v947 = vmax.f32 %v875, 0.0
        %v948 = vmax.f32 %v878, 0.0
        %v949 = vmax.f32 %v883, 0.0
        %v950 = vmax.f32 %v886, 0.0
        %v951 = vmax.f32 %v891, 0.0
        %v952 = vmax.f32 %v894, 0.0
        %v953 = vmax.f32 %v899, 0.0
        %v954 = vmax.f32 %v902, 0.0
        %v955 = vmax.f32 %v907, 0.0
        %v956 = vmax.f32 %v910, 0.0
        %v957 = vmax.f32 %v915, 0.0
        %v958 = vmax.f32 %v918, 0.0
        %v959 = vmax.f32 %v923, 0.0
        %v960 = vmax.f32 %v926, 0.0
        %v961 = vpack.c.bf16 %v930, %v929
        %v962 = vpack.c.bf16 %v932, %v931
        %v963 = vpack.c.bf16 %v934, %v933
        %v964 = vpack.c.bf16 %v936, %v935
        %v965 = vpack.c.bf16 %v938, %v937
        %v966 = vpack.c.bf16 %v940, %v939
        %v967 = vpack.c.bf16 %v942, %v941
        %v968 = vpack.c.bf16 %v944, %v943
        %v969 = vpack.c.bf16 %v946, %v945
        %v970 = vpack.c.bf16 %v948, %v947
        %v971 = vpack.c.bf16 %v950, %v949
        %v972 = vpack.c.bf16 %v952, %v951
        %v973 = vpack.c.bf16 %v954, %v953
        %v974 = vpack.c.bf16 %v956, %v955
        %v975 = vpack.c.bf16 %v958, %v957
        %v976 = vpack.c.bf16 %v960, %v959
        %v977 = vld [vmem:[%s5] sm:$0xf]
        %v978 = vld [vmem:[%s5 + $0x4] sm:$0xf]
        %v979 = vld [vmem:[%s5 + $0x8] sm:$0xf]
        %v980 = vld [vmem:[%s5 + $0xc] sm:$0xf]
        %v981 = vld [vmem:[%s5 + $0x10] sm:$0xf]
        %v982 = vld [vmem:[%s5 + $0x14] sm:$0xf]
        %v983 = vld [vmem:[%s5 + $0x18] sm:$0xf]
        %v984 = vld [vmem:[%s5 + $0x1c] sm:$0xf]
        %v985 = vld [vmem:[%s5 + $0x20] sm:$0xf]
        %v986 = vld [vmem:[%s5 + $0x24] sm:$0xf]
        %v987 = vld [vmem:[%s5 + $0x28] sm:$0xf]
        %v988 = vld [vmem:[%s5 + $0x2c] sm:$0xf]
        %v989 = vld [vmem:[%s5 + $0x30] sm:$0xf]
        %v990 = vld [vmem:[%s5 + $0x34] sm:$0xf]
        %v991 = vld [vmem:[%s5 + $0x38] sm:$0xf]
        %v992 = vld [vmem:[%s5 + $0x3c] sm:$0xf]
        %v993 = vld [vmem:[%s6] sm:$0x1]
        %v995 = vlaneseq
        %v996 = vshrl.u32 %v995, 7
        %v997 = vsub.s32 0, %v996
        %v998 = vrot.slane %v993, %v997
        %v1016 = vunpack.c.l.b16 %v977
        %v1017 = vunpack.c.l.b16 %v978
        %v1018 = vunpack.c.l.b16 %v979
        %v1019 = vunpack.c.l.b16 %v980
        %v1020 = vunpack.c.l.b16 %v981
        %v1021 = vunpack.c.l.b16 %v982
        %v1022 = vunpack.c.l.b16 %v983
        %v1023 = vunpack.c.l.b16 %v984
        %v1024 = vunpack.c.l.b16 %v985
        %v1025 = vunpack.c.l.b16 %v986
        %v1026 = vunpack.c.l.b16 %v987
        %v1027 = vunpack.c.l.b16 %v988
        %v1028 = vunpack.c.l.b16 %v989
        %v1029 = vunpack.c.l.b16 %v990
        %v1030 = vunpack.c.l.b16 %v991
        %v1031 = vunpack.c.l.b16 %v992
        %v1032 = vpack.c.b16 %v1017, %v1016
        %v1033 = vpack.c.b16 %v1019, %v1018
        %v1034 = vpack.c.b16 %v1021, %v1020
        %v1035 = vpack.c.b16 %v1023, %v1022
        %v1036 = vpack.c.b16 %v1025, %v1024
        %v1037 = vpack.c.b16 %v1027, %v1026
        %v1038 = vpack.c.b16 %v1029, %v1028
        %v1039 = vpack.c.b16 %v1031, %v1030
        %1048 = vmatprep.subr.bf16.mxu0 0
        %1049 = vmatpush1.bf16.msra.mxu0 %v1032
        %1050 = vmatprep.subr.bf16.mxu0 0
        %1051 = vmatpush1.bf16.msra.mxu0 %v1033
        %1052 = vmatprep.subr.bf16.mxu0 0
        %1053 = vmatpush1.bf16.msra.mxu0 %v1034
        %1054 = vmatprep.subr.bf16.mxu0 0
        %1055 = vmatpush1.bf16.msra.mxu0 %v1035
        %1056 = vmatprep.subr.bf16.mxu0 0
        %1057 = vmatpush1.bf16.msra.mxu0 %v1036
        %1058 = vmatprep.subr.bf16.mxu0 0
        %1059 = vmatpush1.bf16.msra.mxu0 %v1037
        %1060 = vmatprep.subr.bf16.mxu0 0
        %1061 = vmatpush1.bf16.msra.mxu0 %v1038
        %1062 = vmatprep.subr.bf16.mxu0 0
        %1063 = vmatpush1.bf16.msra.mxu0 %v1039
        %1064 = vmatprep.subr.bf16.mxu0 0
        %1065 = vmatpush1.bf16.msra.mxu0 0
        %1066 = vmatprep.subr.bf16.mxu0 0
        %1067 = vmatpush1.bf16.msra.mxu0 0
        %1068 = vmatprep.subr.bf16.mxu0 0
        %1069 = vmatpush1.bf16.msra.mxu0 0
        %1070 = vmatprep.subr.bf16.mxu0 0
        %1071 = vmatpush1.bf16.msra.mxu0 0
        %1072 = vmatprep.subr.bf16.mxu0 0
        %1073 = vmatpush1.bf16.msra.mxu0 0
        %1074 = vmatprep.subr.bf16.mxu0 0
        %1075 = vmatpush1.bf16.msra.mxu0 0
        %1076 = vmatprep.subr.bf16.mxu0 0
        %1077 = vmatpush1.bf16.msra.mxu0 0
        %1078 = vmatprep.subr.bf16.mxu0 0
        %1079 = vmatpush1.bf16.msra.mxu0 0
        %1080 = vmatprep.mubr.bf16.mxu0 0
        %1081 = vmatmul.mubr.bf16.gmra.mrb[0].mxu0 %v961
        %v1082 = vpop.f32.mrb[0].mxu0
        %v1083 = vadd.f32 %v998, %v1082
        %v1084 = vpop.f32.mrb[0].mxu0
        %v1085 = vpop.f32.mrb[0].mxu0
        %v1086 = vadd.f32 %v998, %v1085
        %v1087 = vpop.f32.mrb[0].mxu0
        %1088 = vmatprep.mubr.bf16.mxu0 0
        %1089 = vmatmul.mubr.bf16.gmra.mrb[0].mxu0 %v962
        %v1090 = vpop.f32.mrb[0].mxu0
        %v1091 = vadd.f32 %v998, %v1090
        %v1092 = vpop.f32.mrb[0].mxu0
        %v1093 = vpop.f32.mrb[0].mxu0
        %v1094 = vadd.f32 %v998, %v1093
        %v1095 = vpop.f32.mrb[0].mxu0
        %1096 = vmatprep.mubr.bf16.mxu0 0
        %1097 = vmatmul.mubr.bf16.gmra.mrb[0].mxu0 %v963
        %v1098 = vpop.f32.mrb[0].mxu0
        %v1099 = vadd.f32 %v998, %v1098
        %v1100 = vpop.f32.mrb[0].mxu0
        %v1101 = vpop.f32.mrb[0].mxu0
        %v1102 = vadd.f32 %v998, %v1101
        %v1103 = vpop.f32.mrb[0].mxu0
        %1104 = vmatprep.mubr.bf16.mxu0 0
        %1105 = vmatmul.mubr.bf16.gmra.mrb[0].mxu0 %v964
        %v1106 = vpop.f32.mrb[0].mxu0
        %v1107 = vadd.f32 %v998, %v1106
        %v1108 = vpop.f32.mrb[0].mxu0
        %v1109 = vpop.f32.mrb[0].mxu0
        %v1110 = vadd.f32 %v998, %v1109
        %v1111 = vpop.f32.mrb[0].mxu0
        %1112 = vmatprep.mubr.bf16.mxu0 0
        %1113 = vmatmul.mubr.bf16.gmra.mrb[0].mxu0 %v965
        %v1114 = vpop.f32.mrb[0].mxu0
        %v1115 = vadd.f32 %v998, %v1114
        %v1116 = vpop.f32.mrb[0].mxu0
        %v1117 = vpop.f32.mrb[0].mxu0
        %v1118 = vadd.f32 %v998, %v1117
        %v1119 = vpop.f32.mrb[0].mxu0
        %1120 = vmatprep.mubr.bf16.mxu0 0
        %1121 = vmatmul.mubr.bf16.gmra.mrb[0].mxu0 %v966
        %v1122 = vpop.f32.mrb[0].mxu0
        %v1123 = vadd.f32 %v998, %v1122
        %v1124 = vpop.f32.mrb[0].mxu0
        %v1125 = vpop.f32.mrb[0].mxu0
        %v1126 = vadd.f32 %v998, %v1125
        %v1127 = vpop.f32.mrb[0].mxu0
        %1128 = vmatprep.mubr.bf16.mxu0 0
        %1129 = vmatmul.mubr.bf16.gmra.mrb[0].mxu0 %v967
        %v1130 = vpop.f32.mrb[0].mxu0
        %v1131 = vadd.f32 %v998, %v1130
        %v1132 = vpop.f32.mrb[0].mxu0
        %v1133 = vpop.f32.mrb[0].mxu0
        %v1134 = vadd.f32 %v998, %v1133
        %v1135 = vpop.f32.mrb[0].mxu0
        %1136 = vmatprep.mubr.bf16.mxu0 0
        %1137 = vmatmul.mubr.bf16.gmra.mrb[0].mxu0 %v968
        %v1138 = vpop.f32.mrb[0].mxu0
        %v1139 = vadd.f32 %v998, %v1138
        %v1140 = vpop.f32.mrb[0].mxu0
        %v1141 = vpop.f32.mrb[0].mxu0
        %v1142 = vadd.f32 %v998, %v1141
        %v1143 = vpop.f32.mrb[0].mxu0
        %1144 = vmatprep.mubr.bf16.mxu0 0
        %1145 = vmatmul.mubr.bf16.gmra.mrb[0].mxu0 %v969
        %v1146 = vpop.f32.mrb[0].mxu0
        %v1147 = vadd.f32 %v998, %v1146
        %v1148 = vpop.f32.mrb[0].mxu0
        %v1149 = vpop.f32.mrb[0].mxu0
        %v1150 = vadd.f32 %v998, %v1149
        %v1151 = vpop.f32.mrb[0].mxu0
        %1152 = vmatprep.mubr.bf16.mxu0 0
        %1153 = vmatmul.mubr.bf16.gmra.mrb[0].mxu0 %v970
        %v1154 = vpop.f32.mrb[0].mxu0
        %v1155 = vadd.f32 %v998, %v1154
        %v1156 = vpop.f32.mrb[0].mxu0
        %v1157 = vpop.f32.mrb[0].mxu0
        %v1158 = vadd.f32 %v998, %v1157
        %v1159 = vpop.f32.mrb[0].mxu0
        %1160 = vmatprep.mubr.bf16.mxu0 0
        %1161 = vmatmul.mubr.bf16.gmra.mrb[0].mxu0 %v971
        %v1162 = vpop.f32.mrb[0].mxu0
        %v1163 = vadd.f32 %v998, %v1162
        %v1164 = vpop.f32.mrb[0].mxu0
        %v1165 = vpop.f32.mrb[0].mxu0
        %v1166 = vadd.f32 %v998, %v1165
        %v1167 = vpop.f32.mrb[0].mxu0
        %1168 = vmatprep.mubr.bf16.mxu0 0
        %1169 = vmatmul.mubr.bf16.gmra.mrb[0].mxu0 %v972
        %v1170 = vpop.f32.mrb[0].mxu0
        %v1171 = vadd.f32 %v998, %v1170
        %v1172 = vpop.f32.mrb[0].mxu0
        %v1173 = vpop.f32.mrb[0].mxu0
        %v1174 = vadd.f32 %v998, %v1173
        %v1175 = vpop.f32.mrb[0].mxu0
        %1176 = vmatprep.mubr.bf16.mxu0 0
        %1177 = vmatmul.mubr.bf16.gmra.mrb[0].mxu0 %v973
        %v1178 = vpop.f32.mrb[0].mxu0
        %v1179 = vadd.f32 %v998, %v1178
        %v1180 = vpop.f32.mrb[0].mxu0
        %v1181 = vpop.f32.mrb[0].mxu0
        %v1182 = vadd.f32 %v998, %v1181
        %v1183 = vpop.f32.mrb[0].mxu0
        %1184 = vmatprep.mubr.bf16.mxu0 0
        %1185 = vmatmul.mubr.bf16.gmra.mrb[0].mxu0 %v974
        %v1186 = vpop.f32.mrb[0].mxu0
        %v1187 = vadd.f32 %v998, %v1186
        %v1188 = vpop.f32.mrb[0].mxu0
        %v1189 = vpop.f32.mrb[0].mxu0
        %v1190 = vadd.f32 %v998, %v1189
        %v1191 = vpop.f32.mrb[0].mxu0
        %1192 = vmatprep.mubr.bf16.mxu0 0
        %1193 = vmatmul.mubr.bf16.gmra.mrb[0].mxu0 %v975
        %v1194 = vpop.f32.mrb[0].mxu0
        %v1195 = vadd.f32 %v998, %v1194
        %v1196 = vpop.f32.mrb[0].mxu0
        %v1197 = vpop.f32.mrb[0].mxu0
        %v1198 = vadd.f32 %v998, %v1197
        %v1199 = vpop.f32.mrb[0].mxu0
        %1200 = vmatprep.mubr.bf16.mxu0 0
        %1201 = vmatmul.mubr.bf16.gmra.mrb[0].mxu0 %v976
        %v1202 = vpop.f32.mrb[0].mxu0
        %v1203 = vadd.f32 %v998, %v1202
        %v1204 = vpop.f32.mrb[0].mxu0
        %v1205 = vpop.f32.mrb[0].mxu0
        %v1206 = vadd.f32 %v998, %v1205
        %v1207 = vpop.f32.mrb[0].mxu0
        %1208 = vdwg.mxu0
        %vm1209 = vcmask 31744
        %1210 = vst.msk [vmem:[%s372] sm:$0xff] %vm1209, %v1083
        %1211 = vst.msk [vmem:[%s372 + $0x8] sm:$0xff] %vm1209, %v1086
        %1212 = vst.msk [vmem:[%s372 + $0x10] sm:$0xff] %vm1209, %v1091
        %1213 = vst.msk [vmem:[%s372 + $0x18] sm:$0xff] %vm1209, %v1094
        %1214 = vst.msk [vmem:[%s372 + $0x20] sm:$0xff] %vm1209, %v1099
        %1215 = vst.msk [vmem:[%s372 + $0x28] sm:$0xff] %vm1209, %v1102
        %1216 = vst.msk [vmem:[%s372 + $0x30] sm:$0xff] %vm1209, %v1107
        %1217 = vst.msk [vmem:[%s372 + $0x38] sm:$0xff] %vm1209, %v1110
        %1218 = vst.msk [vmem:[%s372 + $0x40] sm:$0xff] %vm1209, %v1115
        %1219 = vst.msk [vmem:[%s372 + $0x48] sm:$0xff] %vm1209, %v1118
        %1220 = vst.msk [vmem:[%s372 + $0x50] sm:$0xff] %vm1209, %v1123
        %1221 = vst.msk [vmem:[%s372 + $0x58] sm:$0xff] %vm1209, %v1126
        %1222 = vst.msk [vmem:[%s372 + $0x60] sm:$0xff] %vm1209, %v1131
        %1223 = vst.msk [vmem:[%s372 + $0x68] sm:$0xff] %vm1209, %v1134
        %1224 = vst.msk [vmem:[%s372 + $0x70] sm:$0xff] %vm1209, %v1139
        %1225 = vst.msk [vmem:[%s372 + $0x78] sm:$0xff] %vm1209, %v1142
        %1226 = vst.msk [vmem:[%s372 + $0x80] sm:$0xff] %vm1209, %v1147
        %1227 = vst.msk [vmem:[%s372 + $0x88] sm:$0xff] %vm1209, %v1150
        %1228 = vst.msk [vmem:[%s372 + $0x90] sm:$0xff] %vm1209, %v1155
        %1229 = vst.msk [vmem:[%s372 + $0x98] sm:$0xff] %vm1209, %v1158
        %1230 = vst.msk [vmem:[%s372 + $0xa0] sm:$0xff] %vm1209, %v1163
        %1231 = vst.msk [vmem:[%s372 + $0xa8] sm:$0xff] %vm1209, %v1166
        %1232 = vst.msk [vmem:[%s372 + $0xb0] sm:$0xff] %vm1209, %v1171
        %1233 = vst.msk [vmem:[%s372 + $0xb8] sm:$0xff] %vm1209, %v1174
        %1234 = vst.msk [vmem:[%s372 + $0xc0] sm:$0xff] %vm1209, %v1179
        %1235 = vst.msk [vmem:[%s372 + $0xc8] sm:$0xff] %vm1209, %v1182
        %1236 = vst.msk [vmem:[%s372 + $0xd0] sm:$0xff] %vm1209, %v1187
        %1237 = vst.msk [vmem:[%s372 + $0xd8] sm:$0xff] %vm1209, %v1190
        %1238 = vst.msk [vmem:[%s372 + $0xe0] sm:$0xff] %vm1209, %v1195
        %1239 = vst.msk [vmem:[%s372 + $0xe8] sm:$0xff] %vm1209, %v1198
        %1240 = vst.msk [vmem:[%s372 + $0xf0] sm:$0xff] %vm1209, %v1203
        %1241 = vst.msk [vmem:[%s372 + $0xf8] sm:$0xff] %vm1209, %v1206
        %v1242 = vmax.f32 %v1083, 0.0
        %v1243 = vmax.f32 %v1086, 0.0
        %v1244 = vmax.f32 %v1091, 0.0
        %v1245 = vmax.f32 %v1094, 0.0
        %v1246 = vmax.f32 %v1099, 0.0
        %v1247 = vmax.f32 %v1102, 0.0
        %v1248 = vmax.f32 %v1107, 0.0
        %v1249 = vmax.f32 %v1110, 0.0
        %v1250 = vmax.f32 %v1115, 0.0
        %v1251 = vmax.f32 %v1118, 0.0
        %v1252 = vmax.f32 %v1123, 0.0
        %v1253 = vmax.f32 %v1126, 0.0
        %v1254 = vmax.f32 %v1131, 0.0
        %v1255 = vmax.f32 %v1134, 0.0
        %v1256 = vmax.f32 %v1139, 0.0
        %v1257 = vmax.f32 %v1142, 0.0
        %v1258 = vmax.f32 %v1147, 0.0
        %v1259 = vmax.f32 %v1150, 0.0
        %v1260 = vmax.f32 %v1155, 0.0
        %v1261 = vmax.f32 %v1158, 0.0
        %v1262 = vmax.f32 %v1163, 0.0
        %v1263 = vmax.f32 %v1166, 0.0
        %v1264 = vmax.f32 %v1171, 0.0
        %v1265 = vmax.f32 %v1174, 0.0
        %v1266 = vmax.f32 %v1179, 0.0
        %v1267 = vmax.f32 %v1182, 0.0
        %v1268 = vmax.f32 %v1187, 0.0
        %v1269 = vmax.f32 %v1190, 0.0
        %v1270 = vmax.f32 %v1195, 0.0
        %v1271 = vmax.f32 %v1198, 0.0
        %v1272 = vmax.f32 %v1203, 0.0
        %v1273 = vmax.f32 %v1206, 0.0
        %v1274 = vpack.c.bf16 %v1243, %v1242
        %v1275 = vpack.c.bf16 %v1245, %v1244
        %v1276 = vpack.c.bf16 %v1247, %v1246
        %v1277 = vpack.c.bf16 %v1249, %v1248
        %v1278 = vpack.c.bf16 %v1251, %v1250
        %v1279 = vpack.c.bf16 %v1253, %v1252
        %v1280 = vpack.c.bf16 %v1255, %v1254
        %v1281 = vpack.c.bf16 %v1257, %v1256
        %v1282 = vpack.c.bf16 %v1259, %v1258
        %v1283 = vpack.c.bf16 %v1261, %v1260
        %v1284 = vpack.c.bf16 %v1263, %v1262
        %v1285 = vpack.c.bf16 %v1265, %v1264
        %v1286 = vpack.c.bf16 %v1267, %v1266
        %v1287 = vpack.c.bf16 %v1269, %v1268
        %v1288 = vpack.c.bf16 %v1271, %v1270
        %v1289 = vpack.c.bf16 %v1273, %v1272
        %v1290 = vld [vmem:[%s7] sm:$0xf]
        %v1291 = vld [vmem:[%s7 + $0x4] sm:$0xf]
        %v1292 = vld [vmem:[%s7 + $0x8] sm:$0xf]
        %v1293 = vld [vmem:[%s7 + $0xc] sm:$0xf]
        %v1294 = vld [vmem:[%s7 + $0x10] sm:$0xf]
        %v1295 = vld [vmem:[%s7 + $0x14] sm:$0xf]
        %v1296 = vld [vmem:[%s7 + $0x18] sm:$0xf]
        %v1297 = vld [vmem:[%s7 + $0x1c] sm:$0xf]
        %v1298 = vld [vmem:[%s7 + $0x20] sm:$0xf]
        %v1299 = vld [vmem:[%s7 + $0x24] sm:$0xf]
        %v1300 = vld [vmem:[%s7 + $0x28] sm:$0xf]
        %v1301 = vld [vmem:[%s7 + $0x2c] sm:$0xf]
        %v1302 = vld [vmem:[%s7 + $0x30] sm:$0xf]
        %v1303 = vld [vmem:[%s7 + $0x34] sm:$0xf]
        %v1304 = vld [vmem:[%s7 + $0x38] sm:$0xf]
        %v1305 = vld [vmem:[%s7 + $0x3c] sm:$0xf]
        %v1306 = vld [vmem:[%s8] sm:$0x1]
        %v1308 = vlaneseq
        %v1309 = vshrl.u32 %v1308, 7
        %v1310 = vsub.s32 0, %v1309
        %v1311 = vrot.slane %v1306, %v1310
        %v1329 = vunpack.c.l.b16 %v1290
        %v1330 = vunpack.c.l.b16 %v1291
        %v1331 = vunpack.c.l.b16 %v1292
        %v1332 = vunpack.c.l.b16 %v1293
        %v1333 = vunpack.c.l.b16 %v1294
        %v1334 = vunpack.c.l.b16 %v1295
        %v1335 = vunpack.c.l.b16 %v1296
        %v1336 = vunpack.c.l.b16 %v1297
        %v1337 = vunpack.c.l.b16 %v1298
        %v1338 = vunpack.c.l.b16 %v1299
        %v1339 = vunpack.c.l.b16 %v1300
        %v1340 = vunpack.c.l.b16 %v1301
        %v1341 = vunpack.c.l.b16 %v1302
        %v1342 = vunpack.c.l.b16 %v1303
        %v1343 = vunpack.c.l.b16 %v1304
        %v1344 = vunpack.c.l.b16 %v1305
        %v1345 = vpack.c.b16 %v1330, %v1329
        %v1346 = vpack.c.b16 %v1332, %v1331
        %v1347 = vpack.c.b16 %v1334, %v1333
        %v1348 = vpack.c.b16 %v1336, %v1335
        %v1349 = vpack.c.b16 %v1338, %v1337
        %v1350 = vpack.c.b16 %v1340, %v1339
        %v1351 = vpack.c.b16 %v1342, %v1341
        %v1352 = vpack.c.b16 %v1344, %v1343
        %1361 = vmatprep.subr.bf16.mxu0 0
        %1362 = vmatpush1.bf16.msra.mxu0 %v1345
        %1363 = vmatprep.subr.bf16.mxu0 0
        %1364 = vmatpush1.bf16.msra.mxu0 %v1346
        %1365 = vmatprep.subr.bf16.mxu0 0
        %1366 = vmatpush1.bf16.msra.mxu0 %v1347
        %1367 = vmatprep.subr.bf16.mxu0 0
        %1368 = vmatpush1.bf16.msra.mxu0 %v1348
        %1369 = vmatprep.subr.bf16.mxu0 0
        %1370 = vmatpush1.bf16.msra.mxu0 %v1349
        %1371 = vmatprep.subr.bf16.mxu0 0
        %1372 = vmatpush1.bf16.msra.mxu0 %v1350
        %1373 = vmatprep.subr.bf16.mxu0 0
        %1374 = vmatpush1.bf16.msra.mxu0 %v1351
        %1375 = vmatprep.subr.bf16.mxu0 0
        %1376 = vmatpush1.bf16.msra.mxu0 %v1352
        %1377 = vmatprep.subr.bf16.mxu0 0
        %1378 = vmatpush1.bf16.msra.mxu0 0
        %1379 = vmatprep.subr.bf16.mxu0 0
        %1380 = vmatpush1.bf16.msra.mxu0 0
        %1381 = vmatprep.subr.bf16.mxu0 0
        %1382 = vmatpush1.bf16.msra.mxu0 0
        %1383 = vmatprep.subr.bf16.mxu0 0
        %1384 = vmatpush1.bf16.msra.mxu0 0
        %1385 = vmatprep.subr.bf16.mxu0 0
        %1386 = vmatpush1.bf16.msra.mxu0 0
        %1387 = vmatprep.subr.bf16.mxu0 0
        %1388 = vmatpush1.bf16.msra.mxu0 0
        %1389 = vmatprep.subr.bf16.mxu0 0
        %1390 = vmatpush1.bf16.msra.mxu0 0
        %1391 = vmatprep.subr.bf16.mxu0 0
        %1392 = vmatpush1.bf16.msra.mxu0 0
        %1393 = vmatprep.mubr.bf16.mxu0 0
        %1394 = vmatmul.mubr.bf16.gmra.mrb[0].mxu0 %v1274
        %v1395 = vpop.f32.mrb[0].mxu0
        %v1396 = vadd.f32 %v1311, %v1395
        %v1397 = vpop.f32.mrb[0].mxu0
        %v1398 = vpop.f32.mrb[0].mxu0
        %v1399 = vadd.f32 %v1311, %v1398
        %v1400 = vpop.f32.mrb[0].mxu0
        %1401 = vmatprep.mubr.bf16.mxu0 0
        %1402 = vmatmul.mubr.bf16.gmra.mrb[0].mxu0 %v1275
        %v1403 = vpop.f32.mrb[0].mxu0
        %v1404 = vadd.f32 %v1311, %v1403
        %v1405 = vpop.f32.mrb[0].mxu0
        %v1406 = vpop.f32.mrb[0].mxu0
        %v1407 = vadd.f32 %v1311, %v1406
        %v1408 = vpop.f32.mrb[0].mxu0
        %1409 = vmatprep.mubr.bf16.mxu0 0
        %1410 = vmatmul.mubr.bf16.gmra.mrb[0].mxu0 %v1276
        %v1411 = vpop.f32.mrb[0].mxu0
        %v1412 = vadd.f32 %v1311, %v1411
        %v1413 = vpop.f32.mrb[0].mxu0
        %v1414 = vpop.f32.mrb[0].mxu0
        %v1415 = vadd.f32 %v1311, %v1414
        %v1416 = vpop.f32.mrb[0].mxu0
        %1417 = vmatprep.mubr.bf16.mxu0 0
        %1418 = vmatmul.mubr.bf16.gmra.mrb[0].mxu0 %v1277
        %v1419 = vpop.f32.mrb[0].mxu0
        %v1420 = vadd.f32 %v1311, %v1419
        %v1421 = vpop.f32.mrb[0].mxu0
        %v1422 = vpop.f32.mrb[0].mxu0
        %v1423 = vadd.f32 %v1311, %v1422
        %v1424 = vpop.f32.mrb[0].mxu0
        %1425 = vmatprep.mubr.bf16.mxu0 0
        %1426 = vmatmul.mubr.bf16.gmra.mrb[0].mxu0 %v1278
        %v1427 = vpop.f32.mrb[0].mxu0
        %v1428 = vadd.f32 %v1311, %v1427
        %v1429 = vpop.f32.mrb[0].mxu0
        %v1430 = vpop.f32.mrb[0].mxu0
        %v1431 = vadd.f32 %v1311, %v1430
        %v1432 = vpop.f32.mrb[0].mxu0
        %1433 = vmatprep.mubr.bf16.mxu0 0
        %1434 = vmatmul.mubr.bf16.gmra.mrb[0].mxu0 %v1279
        %v1435 = vpop.f32.mrb[0].mxu0
        %v1436 = vadd.f32 %v1311, %v1435
        %v1437 = vpop.f32.mrb[0].mxu0
        %v1438 = vpop.f32.mrb[0].mxu0
        %v1439 = vadd.f32 %v1311, %v1438
        %v1440 = vpop.f32.mrb[0].mxu0
        %1441 = vmatprep.mubr.bf16.mxu0 0
        %1442 = vmatmul.mubr.bf16.gmra.mrb[0].mxu0 %v1280
        %v1443 = vpop.f32.mrb[0].mxu0
        %v1444 = vadd.f32 %v1311, %v1443
        %v1445 = vpop.f32.mrb[0].mxu0
        %v1446 = vpop.f32.mrb[0].mxu0
        %v1447 = vadd.f32 %v1311, %v1446
        %v1448 = vpop.f32.mrb[0].mxu0
        %1449 = vmatprep.mubr.bf16.mxu0 0
        %1450 = vmatmul.mubr.bf16.gmra.mrb[0].mxu0 %v1281
        %v1451 = vpop.f32.mrb[0].mxu0
        %v1452 = vadd.f32 %v1311, %v1451
        %v1453 = vpop.f32.mrb[0].mxu0
        %v1454 = vpop.f32.mrb[0].mxu0
        %v1455 = vadd.f32 %v1311, %v1454
        %v1456 = vpop.f32.mrb[0].mxu0
        %1457 = vmatprep.mubr.bf16.mxu0 0
        %1458 = vmatmul.mubr.bf16.gmra.mrb[0].mxu0 %v1282
        %v1459 = vpop.f32.mrb[0].mxu0
        %v1460 = vadd.f32 %v1311, %v1459
        %v1461 = vpop.f32.mrb[0].mxu0
        %v1462 = vpop.f32.mrb[0].mxu0
        %v1463 = vadd.f32 %v1311, %v1462
        %v1464 = vpop.f32.mrb[0].mxu0
        %1465 = vmatprep.mubr.bf16.mxu0 0
        %1466 = vmatmul.mubr.bf16.gmra.mrb[0].mxu0 %v1283
        %v1467 = vpop.f32.mrb[0].mxu0
        %v1468 = vadd.f32 %v1311, %v1467
        %v1469 = vpop.f32.mrb[0].mxu0
        %v1470 = vpop.f32.mrb[0].mxu0
        %v1471 = vadd.f32 %v1311, %v1470
        %v1472 = vpop.f32.mrb[0].mxu0
        %1473 = vmatprep.mubr.bf16.mxu0 0
        %1474 = vmatmul.mubr.bf16.gmra.mrb[0].mxu0 %v1284
        %v1475 = vpop.f32.mrb[0].mxu0
        %v1476 = vadd.f32 %v1311, %v1475
        %v1477 = vpop.f32.mrb[0].mxu0
        %v1478 = vpop.f32.mrb[0].mxu0
        %v1479 = vadd.f32 %v1311, %v1478
        %v1480 = vpop.f32.mrb[0].mxu0
        %1481 = vmatprep.mubr.bf16.mxu0 0
        %1482 = vmatmul.mubr.bf16.gmra.mrb[0].mxu0 %v1285
        %v1483 = vpop.f32.mrb[0].mxu0
        %v1484 = vadd.f32 %v1311, %v1483
        %v1485 = vpop.f32.mrb[0].mxu0
        %v1486 = vpop.f32.mrb[0].mxu0
        %v1487 = vadd.f32 %v1311, %v1486
        %v1488 = vpop.f32.mrb[0].mxu0
        %1489 = vmatprep.mubr.bf16.mxu0 0
        %1490 = vmatmul.mubr.bf16.gmra.mrb[0].mxu0 %v1286
        %v1491 = vpop.f32.mrb[0].mxu0
        %v1492 = vadd.f32 %v1311, %v1491
        %v1493 = vpop.f32.mrb[0].mxu0
        %v1494 = vpop.f32.mrb[0].mxu0
        %v1495 = vadd.f32 %v1311, %v1494
        %v1496 = vpop.f32.mrb[0].mxu0
        %1497 = vmatprep.mubr.bf16.mxu0 0
        %1498 = vmatmul.mubr.bf16.gmra.mrb[0].mxu0 %v1287
        %v1499 = vpop.f32.mrb[0].mxu0
        %v1500 = vadd.f32 %v1311, %v1499
        %v1501 = vpop.f32.mrb[0].mxu0
        %v1502 = vpop.f32.mrb[0].mxu0
        %v1503 = vadd.f32 %v1311, %v1502
        %v1504 = vpop.f32.mrb[0].mxu0
        %1505 = vmatprep.mubr.bf16.mxu0 0
        %1506 = vmatmul.mubr.bf16.gmra.mrb[0].mxu0 %v1288
        %v1507 = vpop.f32.mrb[0].mxu0
        %v1508 = vadd.f32 %v1311, %v1507
        %v1509 = vpop.f32.mrb[0].mxu0
        %v1510 = vpop.f32.mrb[0].mxu0
        %v1511 = vadd.f32 %v1311, %v1510
        %v1512 = vpop.f32.mrb[0].mxu0
        %1513 = vmatprep.mubr.bf16.mxu0 0
        %1514 = vmatmul.mubr.bf16.gmra.mrb[0].mxu0 %v1289
        %v1515 = vpop.f32.mrb[0].mxu0
        %v1516 = vadd.f32 %v1311, %v1515
        %v1517 = vpop.f32.mrb[0].mxu0
        %v1518 = vpop.f32.mrb[0].mxu0
        %v1519 = vadd.f32 %v1311, %v1518
        %v1520 = vpop.f32.mrb[0].mxu0
        %1521 = vdwg.mxu0
        %v1522 = vtanh.pop %v1396
        %v1523 = vtanh.pop %v1399
        %v1524 = vtanh.pop %v1404
        %v1525 = vtanh.pop %v1407
        %v1526 = vtanh.pop %v1412
        %v1527 = vtanh.pop %v1415
        %v1528 = vtanh.pop %v1420
        %v1529 = vtanh.pop %v1423
        %v1530 = vtanh.pop %v1428
        %v1531 = vtanh.pop %v1431
        %v1532 = vtanh.pop %v1436
        %v1533 = vtanh.pop %v1439
        %v1534 = vtanh.pop %v1444
        %v1535 = vtanh.pop %v1447
        %v1536 = vtanh.pop %v1452
        %v1537 = vtanh.pop %v1455
        %v1538 = vtanh.pop %v1460
        %v1539 = vtanh.pop %v1463
        %v1540 = vtanh.pop %v1468
        %v1541 = vtanh.pop %v1471
        %v1542 = vtanh.pop %v1476
        %v1543 = vtanh.pop %v1479
        %v1544 = vtanh.pop %v1484
        %v1545 = vtanh.pop %v1487
        %v1546 = vtanh.pop %v1492
        %v1547 = vtanh.pop %v1495
        %v1548 = vtanh.pop %v1500
        %v1549 = vtanh.pop %v1503
        %v1550 = vtanh.pop %v1508
        %v1551 = vtanh.pop %v1511
        %v1552 = vtanh.pop %v1516
        %v1553 = vtanh.pop %v1519
        %v1554 = vpack.c.bf16 %v1523, %v1522
        %v1555 = vpack.c.bf16 %v1525, %v1524
        %v1556 = vpack.c.bf16 %v1527, %v1526
        %v1557 = vpack.c.bf16 %v1529, %v1528
        %v1558 = vpack.c.bf16 %v1531, %v1530
        %v1559 = vpack.c.bf16 %v1533, %v1532
        %v1560 = vpack.c.bf16 %v1535, %v1534
        %v1561 = vpack.c.bf16 %v1537, %v1536
        %v1562 = vpack.c.bf16 %v1539, %v1538
        %v1563 = vpack.c.bf16 %v1541, %v1540
        %v1564 = vpack.c.bf16 %v1543, %v1542
        %v1565 = vpack.c.bf16 %v1545, %v1544
        %v1566 = vpack.c.bf16 %v1547, %v1546
        %v1567 = vpack.c.bf16 %v1549, %v1548
        %v1568 = vpack.c.bf16 %v1551, %v1550
        %v1569 = vpack.c.bf16 %v1553, %v1552
        %v1586 = vunpack.c.l.b16 %v1554
        %v1587 = vunpack.c.h.b16 %v1554
        %v1588 = vunpack.c.l.b16 %v1555
        %v1589 = vunpack.c.h.b16 %v1555
        %v1590 = vunpack.c.l.b16 %v1556
        %v1591 = vunpack.c.h.b16 %v1556
        %v1592 = vunpack.c.l.b16 %v1557
        %v1593 = vunpack.c.h.b16 %v1557
        %v1594 = vunpack.c.l.b16 %v1558
        %v1595 = vunpack.c.h.b16 %v1558
        %v1596 = vunpack.c.l.b16 %v1559
        %v1597 = vunpack.c.h.b16 %v1559
        %v1598 = vunpack.c.l.b16 %v1560
        %v1599 = vunpack.c.h.b16 %v1560
        %v1600 = vunpack.c.l.b16 %v1561
        %v1601 = vunpack.c.h.b16 %v1561
        %v1602 = vunpack.c.l.b16 %v1562
        %v1603 = vunpack.c.h.b16 %v1562
        %v1604 = vunpack.c.l.b16 %v1563
        %v1605 = vunpack.c.h.b16 %v1563
        %v1606 = vunpack.c.l.b16 %v1564
        %v1607 = vunpack.c.h.b16 %v1564
        %v1608 = vunpack.c.l.b16 %v1565
        %v1609 = vunpack.c.h.b16 %v1565
        %v1610 = vunpack.c.l.b16 %v1566
        %v1611 = vunpack.c.h.b16 %v1566
        %v1612 = vunpack.c.l.b16 %v1567
        %v1613 = vunpack.c.h.b16 %v1567
        %v1614 = vunpack.c.l.b16 %v1568
        %v1615 = vunpack.c.h.b16 %v1568
        %v1616 = vunpack.c.l.b16 %v1569
        %v1617 = vunpack.c.h.b16 %v1569
        %v1618 = vpack.c.b16 %v1586, %v1586
        %v1619 = vpack.c.b16 %v1587, %v1587
        %v1620 = vpack.c.b16 %v1588, %v1588
        %v1621 = vpack.c.b16 %v1589, %v1589
        %v1622 = vpack.c.b16 %v1590, %v1590
        %v1623 = vpack.c.b16 %v1591, %v1591
        %v1624 = vpack.c.b16 %v1592, %v1592
        %v1625 = vpack.c.b16 %v1593, %v1593
        %v1626 = vpack.c.b16 %v1594, %v1594
        %v1627 = vpack.c.b16 %v1595, %v1595
        %v1628 = vpack.c.b16 %v1596, %v1596
        %v1629 = vpack.c.b16 %v1597, %v1597
        %v1630 = vpack.c.b16 %v1598, %v1598
        %v1631 = vpack.c.b16 %v1599, %v1599
        %v1632 = vpack.c.b16 %v1600, %v1600
        %v1633 = vpack.c.b16 %v1601, %v1601
        %v1634 = vpack.c.b16 %v1602, %v1602
        %v1635 = vpack.c.b16 %v1603, %v1603
        %v1636 = vpack.c.b16 %v1604, %v1604
        %v1637 = vpack.c.b16 %v1605, %v1605
        %v1638 = vpack.c.b16 %v1606, %v1606
        %v1639 = vpack.c.b16 %v1607, %v1607
        %v1640 = vpack.c.b16 %v1608, %v1608
        %v1641 = vpack.c.b16 %v1609, %v1609
        %v1642 = vpack.c.b16 %v1610, %v1610
        %v1643 = vpack.c.b16 %v1611, %v1611
        %v1644 = vpack.c.b16 %v1612, %v1612
        %v1645 = vpack.c.b16 %v1613, %v1613
        %v1646 = vpack.c.b16 %v1614, %v1614
        %v1647 = vpack.c.b16 %v1615, %v1615
        %v1648 = vpack.c.b16 %v1616, %v1616
        %v1649 = vpack.c.b16 %v1617, %v1617
        %1682 = vst [vmem:[%s361] sm:$0xf] %v1618
        %1683 = vst [vmem:[%s361 + $0x4] sm:$0xf] %v1619
        %1684 = vst [vmem:[%s361 + $0x8] sm:$0xf] %v1620
        %1685 = vst [vmem:[%s361 + $0xc] sm:$0xf] %v1621
        %1686 = vst [vmem:[%s361 + $0x10] sm:$0xf] %v1622
        %1687 = vst [vmem:[%s361 + $0x14] sm:$0xf] %v1623
        %1688 = vst [vmem:[%s361 + $0x18] sm:$0xf] %v1624
        %1689 = vst [vmem:[%s361 + $0x1c] sm:$0xf] %v1625
        %1690 = vst [vmem:[%s361 + $0x20] sm:$0xf] %v1626
        %1691 = vst [vmem:[%s361 + $0x24] sm:$0xf] %v1627
        %1692 = vst [vmem:[%s361 + $0x28] sm:$0xf] %v1628
        %1693 = vst [vmem:[%s361 + $0x2c] sm:$0xf] %v1629
        %1694 = vst [vmem:[%s361 + $0x30] sm:$0xf] %v1630
        %1695 = vst [vmem:[%s361 + $0x34] sm:$0xf] %v1631
        %1696 = vst [vmem:[%s361 + $0x38] sm:$0xf] %v1632
        %1697 = vst [vmem:[%s361 + $0x3c] sm:$0xf] %v1633
        %1698 = vst [vmem:[%s361 + $0x40] sm:$0xf] %v1634
        %1699 = vst [vmem:[%s361 + $0x44] sm:$0xf] %v1635
        %1700 = vst [vmem:[%s361 + $0x48] sm:$0xf] %v1636
        %1701 = vst [vmem:[%s361 + $0x4c] sm:$0xf] %v1637
        %1702 = vst [vmem:[%s361 + $0x50] sm:$0xf] %v1638
        %1703 = vst [vmem:[%s361 + $0x54] sm:$0xf] %v1639
        %1704 = vst [vmem:[%s361 + $0x58] sm:$0xf] %v1640
        %1705 = vst [vmem:[%s361 + $0x5c] sm:$0xf] %v1641
        %1706 = vst [vmem:[%s361 + $0x60] sm:$0xf] %v1642
        %1707 = vst [vmem:[%s361 + $0x64] sm:$0xf] %v1643
        %1708 = vst [vmem:[%s361 + $0x68] sm:$0xf] %v1644
        %1709 = vst [vmem:[%s361 + $0x6c] sm:$0xf] %v1645
        %1710 = vst [vmem:[%s361 + $0x70] sm:$0xf] %v1646
        %1711 = vst [vmem:[%s361 + $0x74] sm:$0xf] %v1647
        %1712 = vst [vmem:[%s361 + $0x78] sm:$0xf] %v1648
        %1713 = vst [vmem:[%s361 + $0x7c] sm:$0xf] %v1649
        %s1714 = smul.u32 32, %s25
        %p1715 = scmp.lt.s32.totalorder %s1714, 63
        %s1716 = scalar_select %p1715, %s1714, 63
        %s1717 = smul.addr %s1716, 8
        %s1718 = scalar_lea.vmem %s9, %s1717
        %s1719 = sand.u32 %s253, 1
        %s1720 = scalar_lea.sflag [#allocation3], %s1719
        %s1721 = sand.u32 %s253, 1
        %s1722 = smul.addr %s1721, 128
        %s1723 = scalar_lea.vmem [#allocation2], %s1722
        // Predicated region
        $region57: #{tpu_custom_call.1} parent=55 // pred_check
          %p1724 = pneg %p237
        $region58: #{tpu_custom_call.1} parent=55 // pred_check_branch
          %1726 = sbr.rel (%p1724) target = $region60
        $region59: #{tpu_custom_call.1} parent=55 // pred_region
          %s1727 = smul.u32 32, %s25
        $region60: #{tpu_custom_call.1} parent=55 // pred_fallthru
          _
        // Predicated region
        $region61: #{tpu_custom_call.1} parent=55 // pred_check
          %p1728 = pneg %p263
        $region62: #{tpu_custom_call.1} parent=55 // pred_check_branch
          %1730 = sbr.rel (%p1728) target = $region64
        $region63: #{tpu_custom_call.1} parent=55 // pred_region
          %s1731 = smul.u32 32, %s25
          %s1733 = ssub.s32 2048, 2048
          %1734 = vsyncadd %s1720, %s1733
          %s1735 = smul.addr %s1731, 64
          %s1736 = scalar_lea.hbm %s10, %s1735
          %s1737 = sshll.u32 %s1723, 4
          %s1738 = int_to_ptr.vmem [resolvable:$true] %s1737
          %1743 = dma.vmem_to_hbm [thread:$0]  %s1738, 2048, %s1736, %s1720, 64, 64, 4
        $region64: #{tpu_custom_call.1} parent=55 // pred_fallthru
          _
      $region56: #{tpu_custom_call.1} parent=5 // pred_fallthru
        _
      %p1744 = scmp.le.s32.totalorder 2, %s20
      // Predicated region
      $region65: #{tpu_custom_call.1} parent=5 // pred_check
        %p1745 = pneg %p1744
      $region66: #{tpu_custom_call.1} parent=5 // pred_check_branch
        %1747 = sbr.rel (%p1745) target = $region68
      $region67: #{tpu_custom_call.1} parent=5 // pred_region
        %s1748 = ssub.s32 %s20, 2
        // Predicated region
        $region69: #{tpu_custom_call.1} parent=67 // pred_check
          %p1749 = pneg %p243
        $region70: #{tpu_custom_call.1} parent=67 // pred_check_branch
          %1751 = sbr.rel (%p1749) target = $region72
        $region71: #{tpu_custom_call.1} parent=67 // pred_region
          %s1752 = smul.u32 32, %s26
          %p1753 = scmp.lt.s32.totalorder %s1752, 63
          %s1754 = scalar_select %p1753, %s1752, 63
          %s1755 = smul.addr %s1754, 8
          %s1756 = scalar_lea.vmem %s9, %s1755
        $region72: #{tpu_custom_call.1} parent=67 // pred_fallthru
          _
        // Predicated region
        $region73: #{tpu_custom_call.1} parent=67 // pred_check
          %p1757 = pneg %p269
        $region74: #{tpu_custom_call.1} parent=67 // pred_check_branch
          %1759 = sbr.rel (%p1757) target = $region76
        $region75: #{tpu_custom_call.1} parent=67 // pred_region
          %s1760 = sand.u32 %s254, 1
          %s1761 = scalar_lea.sflag [#allocation3], %s1760
          %s1762 = sand.u32 %s254, 1
          %s1763 = smul.addr %s1762, 128
          %s1764 = scalar_lea.vmem [#allocation2], %s1763
          %1765 = dma.done %s1761, 2048
        $region76: #{tpu_custom_call.1} parent=67 // pred_fallthru
          _
      $region68: #{tpu_custom_call.1} parent=5 // pred_fallthru
        _
    $region6: #{tpu_custom_call.1} parent=1 // loop_footer
      %s24 = sadd.s32 1, %s20
    $region7: #{tpu_custom_call.1} parent=1 // loop_footer_branch
      %19 = sbr.rel target = $region3
    $region8: #{tpu_custom_call.1} parent=1 // loop_exit
      _
    %1766 = vsyncpa [#allocation3], 1
    %s1767 = scalar_lea.sflag [#allocation3], 1
    %1768 = vsyncpa %s1767, 1

</llo_original>
